<compile_context>
chip_gen: v5e
topology: v5e:2x2
jax: 0.10.0
libtpu: 0.0.40
codegen_flags: <defaults>
</compile_context>

<pallas_src>
import functools

import numpy as np
import jax
import jax.numpy as jnp
from jax.experimental import pallas as pl
from jax.experimental.pallas import tpu as pltpu


def _dwconv_fused_kernel(x_ref, w_ref, b_ref, m_ref, o_ref, *, regions):
    """Fused depthwise 3x3 (stride 1, pad 1) over all three pyramid branches.

    x_ref : (1, N, C)  input token slab for one batch element
    w_ref : (3, 3, C)  per-channel taps (resident)
    b_ref : (1, C)     per-channel bias (resident)
    m_ref : (N, 4)     f32 per-row masks: [left_ok, right_ok, up_ok, down_ok]
    o_ref : (1, N, C)  output token slab
    regions: static tuple of (row_offset, h, w) for the 3 branch images
    """
    # Hoisted: load taps / bias once, cast to f32 once (review item 6).
    wf = w_ref[...].astype(jnp.float32)        # (3, 3, C)
    bias = b_ref[...].astype(jnp.float32)      # (1, C)

    for (r0, h, w) in regions:                 # static unroll over 3 resolutions
        rows = h * w
        xr = x_ref[0, r0:r0 + rows, :].astype(jnp.float32)   # (rows, C)
        m_l = m_ref[r0:r0 + rows, 0:1]          # (rows, 1): col > 0
        m_r = m_ref[r0:r0 + rows, 1:2]          # (rows, 1): col < w-1
        m_t = m_ref[r0:r0 + rows, 2:3]          # (rows, 1): image row above exists
        m_b = m_ref[r0:r0 + rows, 3:4]          # (rows, 1): image row below exists

        # dw = -1 / +1 neighbours: sublane roll (XLU) + per-row validity mask.
        # The mask also zeroes the rows where the roll wrapped around.
        left = pltpu.roll(xr, 1, axis=0) * m_l          # x[r-1]
        right = pltpu.roll(xr, rows - 1, axis=0) * m_r  # x[r+1]

        # Per-kernel-row partial sums; column boundaries already resolved, so
        # they stay valid after the +-w row shift (w divides the shift).
        out = bias + (wf[1, 0] * left + wf[1, 1] * xr + wf[1, 2] * right)   # kh = 1

        q0 = wf[0, 0] * left + wf[0, 1] * xr + wf[0, 2] * right             # kh = 0
        out = out + pltpu.roll(q0, w, axis=0) * m_t          # needs row r - w

        q2 = wf[2, 0] * left + wf[2, 1] * xr + wf[2, 2] * right             # kh = 2
        out = out + pltpu.roll(q2, rows - w, axis=0) * m_b   # needs row r + w

        o_ref[0, r0:r0 + rows, :] = out.astype(o_ref.dtype)


def _row_masks(H, W):
    """Host-precomputed per-token-row boundary masks, (21n, 4) float32."""
    parts = []
    for h, w in ((2 * H, 2 * W), (H, W), (H // 2, W // 2)):
        rows = h * w
        r = np.arange(rows)
        col = r % w
        parts.append(np.stack([col != 0,           # left neighbour exists
                               col != w - 1,       # right neighbour exists
                               r >= w,             # image row above exists
                               r < rows - w],      # image row below exists
                              axis=1).astype(np.float32))
    return np.concatenate(parts, axis=0)


@functools.partial(jax.jit, static_argnums=(1, 2))
def dwconv_module(x, H, W, weight, bias):
    """Reproduces DWConv.forward.

    x: (B, N, C) with N = 21 * n, H*W = 4*n.
    weight: (3, 3, C) depthwise taps (torch (C,1,3,3) -> permute(2,3,1,0).squeeze),
    bias: (C,).  Returns (B, N, C).

    (B, seq, C).reshape(B, h, w, C) is element-wise identical to the PyTorch
    transpose(1,2).view(B, C, h, w); the kernel works directly on the flat
    (seq, C) layout, so no transposes / reshapes are ever materialized.
    """
    B, N, C = x.shape
    assert N % 21 == 0, "N must be a multiple of 21"
    n = N // 21
    assert 4 * n == H * W, "H*W must equal 4*(N//21)"
    assert H % 2 == 0 and W % 2 == 0, "H and W must be even"

    regions = ((0, 2 * H, 2 * W), (16 * n, H, W), (20 * n, H // 2, W // 2))
    masks = jnp.asarray(_row_masks(H, W))                 # (N, 4) f32
    bias2d = bias.reshape(1, C)

    # VMEM budget from actual buffer sizes (review item 7): double-buffered
    # in/out blocks + f32 working set for the largest branch, with headroom.
    io_bytes = N * C * x.dtype.itemsize
    work_bytes = 16 * n * C * 4 * 10
    vmem_limit = int(min(100 << 20, max(16 << 20, 4 * io_bytes + work_bytes + (2 << 20))))

    return pl.pallas_call(
        functools.partial(_dwconv_fused_kernel, regions=regions),
        out_shape=jax.ShapeDtypeStruct((B, N, C), x.dtype),
        grid_spec=pltpu.PrefetchScalarGridSpec(
            num_scalar_prefetch=0,
            grid=(B,),
            in_specs=[
                pl.BlockSpec((1, N, C), lambda b: (b, 0, 0)),
                pl.BlockSpec((3, 3, C), lambda b: (0, 0, 0)),   # resident taps
                pl.BlockSpec((1, C), lambda b: (0, 0)),         # resident bias
                pl.BlockSpec((N, 4), lambda b: (0, 0)),         # resident masks
            ],
            out_specs=pl.BlockSpec((1, N, C), lambda b: (b, 0, 0)),
        ),
        compiler_params=pltpu.CompilerParams(
            dimension_semantics=("parallel",),
            vmem_limit_bytes=vmem_limit),
    )(x, weight, bias2d, masks)


def _reference_dwconv(x, H, W, weight, bias):
    """Pure-JAX reference (lax.conv with feature_group_count) for verification."""
    B, N, C = x.shape
    n = N // 21
    w_hwio = weight.reshape(3, 3, 1, C)

    def conv_one(x_nhwc):
        y = jax.lax.conv_general_dilated(
            x_nhwc, w_hwio, window_strides=(1, 1), padding=((1, 1), (1, 1)),
            dimension_numbers=("NHWC", "HWIO", "NHWC"), feature_group_count=C,
            precision=jax.lax.Precision.HIGHEST)
        return y + bias.reshape(1, 1, 1, C)

    x1 = x[:, 0:16 * n, :].reshape(B, 2 * H, 2 * W, C)
    x2 = x[:, 16 * n:20 * n, :].reshape(B, H, W, C)
    x3 = x[:, 20 * n:, :].reshape(B, H // 2, W // 2, C)
    y1 = conv_one(x1).reshape(B, 16 * n, C)
    y2 = conv_one(x2).reshape(B, 4 * n, C)
    y3 = conv_one(x3).reshape(B, n, C)
    return jnp.concatenate([y1, y2, y3], axis=1)


if __name__ == "__main__":
    # Small shapes consistent with the module: C=128 (multiple of 128 like the
    # default dim=768, so the (N, C) slab is lane-dense), H=W=8 -> n=16, N=336.
    B, C, H, W = 2, 128, 8, 8
    n = (H * W) // 4
    N = 21 * n

    key = jax.random.PRNGKey(0)
    kx, kw, kb = jax.random.split(key, 3)

    x = jax.random.normal(kx, (B, N, C), dtype=jnp.float32)
    # nn.Conv2d(C, C, 3, groups=C) parameters: weight (C,1,3,3), bias (C,);
    # stored here already as (3, 3, C) / (C,).
    weight = jax.random.normal(kw, (3, 3, C), dtype=jnp.float32) * 0.1
    bias = jax.random.normal(kb, (C,), dtype=jnp.float32) * 0.1

    out = jax.block_until_ready(dwconv_module(x, H, W, weight, bias))
    ref = jax.block_until_ready(_reference_dwconv(x, H, W, weight, bias))

    assert out.shape == (B, N, C), out.shape
    assert jnp.allclose(out, ref, atol=1e-5, rtol=1e-5), float(
        jnp.max(jnp.abs(out - ref)))
    print("KERNEL_OK")
</pallas_src>

<mosaic_0001>
module attributes {stable_mosaic.version = 11 : i64} {
  func.func @_dwconv_fused_kernel(%arg0: i32, %arg1: memref<1x336x128xf32, #tpu.memory_space<vmem>>, %arg2: memref<3x3x128xf32, #tpu.memory_space<vmem>>, %arg3: memref<1x128xf32, #tpu.memory_space<vmem>>, %arg4: memref<336x4xf32, #tpu.memory_space<vmem>>, %arg5: memref<1x336x128xf32, #tpu.memory_space<vmem>>) attributes {dimension_semantics = [#tpu.dimension_semantics<parallel>], iteration_bounds = array<i64: 2>, scalar_prefetch = 0 : i64, scratch_operands = 0 : i64, tpu.core_type = #tpu.core_type<tc>, window_params = [{transform_indices = @transform_0, window_bounds = array<i64: 1, 336, 128>}, {pipeline_mode = #tpu.pipeline_mode<synchronous>, transform_indices = @transform_1, window_bounds = array<i64: 3, 3, 128>}, {pipeline_mode = #tpu.pipeline_mode<synchronous>, transform_indices = @transform_2, window_bounds = array<i64: 1, 128>}, {pipeline_mode = #tpu.pipeline_mode<synchronous>, transform_indices = @transform_3, window_bounds = array<i64: 336, 4>}, {transform_indices = @transform_4, window_bounds = array<i64: 1, 336, 128>}]} {
    %c0 = arith.constant 0 : index
    %c0_0 = arith.constant 0 : index
    %c0_1 = arith.constant 0 : index
    %0 = vector.load %arg2[%c0, %c0_0, %c0_1] : memref<3x3x128xf32, #tpu.memory_space<vmem>>, vector<3x3x128xf32>
    %c0_2 = arith.constant 0 : index
    %c0_3 = arith.constant 0 : index
    %1 = vector.load %arg3[%c0_2, %c0_3] : memref<1x128xf32, #tpu.memory_space<vmem>>, vector<1x128xf32>
    %c0_4 = arith.constant 0 : index
    %c0_5 = arith.constant 0 : index
    %c0_6 = arith.constant 0 : index
    %2 = vector.load %arg1[%c0_4, %c0_5, %c0_6] : memref<1x336x128xf32, #tpu.memory_space<vmem>>, vector<1x256x128xf32>
    %3 = vector.shape_cast %2 : vector<1x256x128xf32> to vector<256x128xf32>
    %c0_7 = arith.constant 0 : index
    %c0_8 = arith.constant 0 : index
    %4 = vector.load %arg4[%c0_7, %c0_8] : memref<336x4xf32, #tpu.memory_space<vmem>>, vector<256x1xf32>
    %c0_9 = arith.constant 0 : index
    %c1 = arith.constant 1 : index
    %5 = vector.load %arg4[%c0_9, %c1] : memref<336x4xf32, #tpu.memory_space<vmem>>, vector<256x1xf32>
    %c0_10 = arith.constant 0 : index
    %c2 = arith.constant 2 : index
    %6 = vector.load %arg4[%c0_10, %c2] : memref<336x4xf32, #tpu.memory_space<vmem>>, vector<256x1xf32>
    %c0_11 = arith.constant 0 : index
    %c3 = arith.constant 3 : index
    %7 = vector.load %arg4[%c0_11, %c3] : memref<336x4xf32, #tpu.memory_space<vmem>>, vector<256x1xf32>
    %c1_i32 = arith.constant 1 : i32
    %8 = tpu.dynamic_rotate %3 by %c1_i32 dim 0 : vector<256x128xf32>, i32 -> vector<256x128xf32>
    %9 = vector.broadcast %4 : vector<256x1xf32> to vector<256x128xf32>
    %10 = arith.mulf %8, %9 : vector<256x128xf32>
    %c255_i32 = arith.constant 255 : i32
    %11 = tpu.dynamic_rotate %3 by %c255_i32 dim 0 : vector<256x128xf32>, i32 -> vector<256x128xf32>
    %12 = vector.broadcast %5 : vector<256x1xf32> to vector<256x128xf32>
    %13 = arith.mulf %11, %12 : vector<256x128xf32>
    %14 = vector.extract_strided_slice %0 {offsets = [1, 0, 0], sizes = [1, 1, 128], strides = [1, 1, 1]} : vector<3x3x128xf32> to vector<1x1x128xf32>
    %15 = vector.shape_cast %14 : vector<1x1x128xf32> to vector<128xf32>
    %16 = vector.shape_cast %15 : vector<128xf32> to vector<1x128xf32>
    %17 = vector.broadcast %16 : vector<1x128xf32> to vector<256x128xf32>
    %18 = arith.mulf %17, %10 : vector<256x128xf32>
    %19 = vector.extract_strided_slice %0 {offsets = [1, 1, 0], sizes = [1, 1, 128], strides = [1, 1, 1]} : vector<3x3x128xf32> to vector<1x1x128xf32>
    %20 = vector.shape_cast %19 : vector<1x1x128xf32> to vector<128xf32>
    %21 = vector.shape_cast %20 : vector<128xf32> to vector<1x128xf32>
    %22 = vector.broadcast %21 : vector<1x128xf32> to vector<256x128xf32>
    %23 = arith.mulf %22, %3 : vector<256x128xf32>
    %24 = arith.addf %18, %23 : vector<256x128xf32>
    %25 = vector.extract_strided_slice %0 {offsets = [1, 2, 0], sizes = [1, 1, 128], strides = [1, 1, 1]} : vector<3x3x128xf32> to vector<1x1x128xf32>
    %26 = vector.shape_cast %25 : vector<1x1x128xf32> to vector<128xf32>
    %27 = vector.shape_cast %26 : vector<128xf32> to vector<1x128xf32>
    %28 = vector.broadcast %27 : vector<1x128xf32> to vector<256x128xf32>
    %29 = arith.mulf %28, %13 : vector<256x128xf32>
    %30 = arith.addf %24, %29 : vector<256x128xf32>
    %31 = vector.broadcast %1 : vector<1x128xf32> to vector<256x128xf32>
    %32 = arith.addf %31, %30 : vector<256x128xf32>
    %33 = vector.extract_strided_slice %0 {offsets = [0, 0, 0], sizes = [1, 1, 128], strides = [1, 1, 1]} : vector<3x3x128xf32> to vector<1x1x128xf32>
    %34 = vector.shape_cast %33 : vector<1x1x128xf32> to vector<128xf32>
    %35 = vector.shape_cast %34 : vector<128xf32> to vector<1x128xf32>
    %36 = vector.broadcast %35 : vector<1x128xf32> to vector<256x128xf32>
    %37 = arith.mulf %36, %10 : vector<256x128xf32>
    %38 = vector.extract_strided_slice %0 {offsets = [0, 1, 0], sizes = [1, 1, 128], strides = [1, 1, 1]} : vector<3x3x128xf32> to vector<1x1x128xf32>
    %39 = vector.shape_cast %38 : vector<1x1x128xf32> to vector<128xf32>
    %40 = vector.shape_cast %39 : vector<128xf32> to vector<1x128xf32>
    %41 = vector.broadcast %40 : vector<1x128xf32> to vector<256x128xf32>
    %42 = arith.mulf %41, %3 : vector<256x128xf32>
    %43 = arith.addf %37, %42 : vector<256x128xf32>
    %44 = vector.extract_strided_slice %0 {offsets = [0, 2, 0], sizes = [1, 1, 128], strides = [1, 1, 1]} : vector<3x3x128xf32> to vector<1x1x128xf32>
    %45 = vector.shape_cast %44 : vector<1x1x128xf32> to vector<128xf32>
    %46 = vector.shape_cast %45 : vector<128xf32> to vector<1x128xf32>
    %47 = vector.broadcast %46 : vector<1x128xf32> to vector<256x128xf32>
    %48 = arith.mulf %47, %13 : vector<256x128xf32>
    %49 = arith.addf %43, %48 : vector<256x128xf32>
    %c16_i32 = arith.constant 16 : i32
    %50 = tpu.dynamic_rotate %49 by %c16_i32 dim 0 : vector<256x128xf32>, i32 -> vector<256x128xf32>
    %51 = vector.broadcast %6 : vector<256x1xf32> to vector<256x128xf32>
    %52 = arith.mulf %50, %51 : vector<256x128xf32>
    %53 = arith.addf %32, %52 : vector<256x128xf32>
    %54 = vector.extract_strided_slice %0 {offsets = [2, 0, 0], sizes = [1, 1, 128], strides = [1, 1, 1]} : vector<3x3x128xf32> to vector<1x1x128xf32>
    %55 = vector.shape_cast %54 : vector<1x1x128xf32> to vector<128xf32>
    %56 = vector.shape_cast %55 : vector<128xf32> to vector<1x128xf32>
    %57 = vector.broadcast %56 : vector<1x128xf32> to vector<256x128xf32>
    %58 = arith.mulf %57, %10 : vector<256x128xf32>
    %59 = vector.extract_strided_slice %0 {offsets = [2, 1, 0], sizes = [1, 1, 128], strides = [1, 1, 1]} : vector<3x3x128xf32> to vector<1x1x128xf32>
    %60 = vector.shape_cast %59 : vector<1x1x128xf32> to vector<128xf32>
    %61 = vector.shape_cast %60 : vector<128xf32> to vector<1x128xf32>
    %62 = vector.broadcast %61 : vector<1x128xf32> to vector<256x128xf32>
    %63 = arith.mulf %62, %3 : vector<256x128xf32>
    %64 = arith.addf %58, %63 : vector<256x128xf32>
    %65 = vector.extract_strided_slice %0 {offsets = [2, 2, 0], sizes = [1, 1, 128], strides = [1, 1, 1]} : vector<3x3x128xf32> to vector<1x1x128xf32>
    %66 = vector.shape_cast %65 : vector<1x1x128xf32> to vector<128xf32>
    %67 = vector.shape_cast %66 : vector<128xf32> to vector<1x128xf32>
    %68 = vector.broadcast %67 : vector<1x128xf32> to vector<256x128xf32>
    %69 = arith.mulf %68, %13 : vector<256x128xf32>
    %70 = arith.addf %64, %69 : vector<256x128xf32>
    %c240_i32 = arith.constant 240 : i32
    %71 = tpu.dynamic_rotate %70 by %c240_i32 dim 0 : vector<256x128xf32>, i32 -> vector<256x128xf32>
    %72 = vector.broadcast %7 : vector<256x1xf32> to vector<256x128xf32>
    %73 = arith.mulf %71, %72 : vector<256x128xf32>
    %74 = arith.addf %53, %73 : vector<256x128xf32>
    %c0_12 = arith.constant 0 : index
    %c0_13 = arith.constant 0 : index
    %c0_14 = arith.constant 0 : index
    %75 = vector.load %arg5[%c0_12, %c0_13, %c0_14] : memref<1x336x128xf32, #tpu.memory_space<vmem>>, vector<1x256x128xf32>
    %76 = vector.shape_cast %75 : vector<1x256x128xf32> to vector<256x128xf32>
    %77 = vector.shape_cast %74 : vector<256x128xf32> to vector<1x256x128xf32>
    tpu.vector_store %arg5[%c0_12, %c0_13, %c0_14], %77 {strides = array<i32>} : memref<1x336x128xf32, #tpu.memory_space<vmem>>, vector<1x256x128xf32>,
    %c0_15 = arith.constant 0 : index
    %c256 = arith.constant 256 : index
    %c0_16 = arith.constant 0 : index
    %78 = vector.load %arg1[%c0_15, %c256, %c0_16] : memref<1x336x128xf32, #tpu.memory_space<vmem>>, vector<1x64x128xf32>
    %79 = vector.shape_cast %78 : vector<1x64x128xf32> to vector<64x128xf32>
    %c256_17 = arith.constant 256 : index
    %c0_18 = arith.constant 0 : index
    %80 = vector.load %arg4[%c256_17, %c0_18] : memref<336x4xf32, #tpu.memory_space<vmem>>, vector<64x1xf32>
    %c256_19 = arith.constant 256 : index
    %c1_20 = arith.constant 1 : index
    %81 = vector.load %arg4[%c256_19, %c1_20] : memref<336x4xf32, #tpu.memory_space<vmem>>, vector<64x1xf32>
    %c256_21 = arith.constant 256 : index
    %c2_22 = arith.constant 2 : index
    %82 = vector.load %arg4[%c256_21, %c2_22] : memref<336x4xf32, #tpu.memory_space<vmem>>, vector<64x1xf32>
    %c256_23 = arith.constant 256 : index
    %c3_24 = arith.constant 3 : index
    %83 = vector.load %arg4[%c256_23, %c3_24] : memref<336x4xf32, #tpu.memory_space<vmem>>, vector<64x1xf32>
    %c1_i32_25 = arith.constant 1 : i32
    %84 = tpu.dynamic_rotate %79 by %c1_i32_25 dim 0 : vector<64x128xf32>, i32 -> vector<64x128xf32>
    %85 = vector.broadcast %80 : vector<64x1xf32> to vector<64x128xf32>
    %86 = arith.mulf %84, %85 : vector<64x128xf32>
    %c63_i32 = arith.constant 63 : i32
    %87 = tpu.dynamic_rotate %79 by %c63_i32 dim 0 : vector<64x128xf32>, i32 -> vector<64x128xf32>
    %88 = vector.broadcast %81 : vector<64x1xf32> to vector<64x128xf32>
    %89 = arith.mulf %87, %88 : vector<64x128xf32>
    %90 = vector.extract_strided_slice %0 {offsets = [1, 0, 0], sizes = [1, 1, 128], strides = [1, 1, 1]} : vector<3x3x128xf32> to vector<1x1x128xf32>
    %91 = vector.shape_cast %90 : vector<1x1x128xf32> to vector<128xf32>
    %92 = vector.shape_cast %91 : vector<128xf32> to vector<1x128xf32>
    %93 = vector.broadcast %92 : vector<1x128xf32> to vector<64x128xf32>
    %94 = arith.mulf %93, %86 : vector<64x128xf32>
    %95 = vector.extract_strided_slice %0 {offsets = [1, 1, 0], sizes = [1, 1, 128], strides = [1, 1, 1]} : vector<3x3x128xf32> to vector<1x1x128xf32>
    %96 = vector.shape_cast %95 : vector<1x1x128xf32> to vector<128xf32>
    %97 = vector.shape_cast %96 : vector<128xf32> to vector<1x128xf32>
    %98 = vector.broadcast %97 : vector<1x128xf32> to vector<64x128xf32>
    %99 = arith.mulf %98, %79 : vector<64x128xf32>
    %100 = arith.addf %94, %99 : vector<64x128xf32>
    %101 = vector.extract_strided_slice %0 {offsets = [1, 2, 0], sizes = [1, 1, 128], strides = [1, 1, 1]} : vector<3x3x128xf32> to vector<1x1x128xf32>
    %102 = vector.shape_cast %101 : vector<1x1x128xf32> to vector<128xf32>
    %103 = vector.shape_cast %102 : vector<128xf32> to vector<1x128xf32>
    %104 = vector.broadcast %103 : vector<1x128xf32> to vector<64x128xf32>
    %105 = arith.mulf %104, %89 : vector<64x128xf32>
    %106 = arith.addf %100, %105 : vector<64x128xf32>
    %107 = vector.broadcast %1 : vector<1x128xf32> to vector<64x128xf32>
    %108 = arith.addf %107, %106 : vector<64x128xf32>
    %109 = vector.extract_strided_slice %0 {offsets = [0, 0, 0], sizes = [1, 1, 128], strides = [1, 1, 1]} : vector<3x3x128xf32> to vector<1x1x128xf32>
    %110 = vector.shape_cast %109 : vector<1x1x128xf32> to vector<128xf32>
    %111 = vector.shape_cast %110 : vector<128xf32> to vector<1x128xf32>
    %112 = vector.broadcast %111 : vector<1x128xf32> to vector<64x128xf32>
    %113 = arith.mulf %112, %86 : vector<64x128xf32>
    %114 = vector.extract_strided_slice %0 {offsets = [0, 1, 0], sizes = [1, 1, 128], strides = [1, 1, 1]} : vector<3x3x128xf32> to vector<1x1x128xf32>
    %115 = vector.shape_cast %114 : vector<1x1x128xf32> to vector<128xf32>
    %116 = vector.shape_cast %115 : vector<128xf32> to vector<1x128xf32>
    %117 = vector.broadcast %116 : vector<1x128xf32> to vector<64x128xf32>
    %118 = arith.mulf %117, %79 : vector<64x128xf32>
    %119 = arith.addf %113, %118 : vector<64x128xf32>
    %120 = vector.extract_strided_slice %0 {offsets = [0, 2, 0], sizes = [1, 1, 128], strides = [1, 1, 1]} : vector<3x3x128xf32> to vector<1x1x128xf32>
    %121 = vector.shape_cast %120 : vector<1x1x128xf32> to vector<128xf32>
    %122 = vector.shape_cast %121 : vector<128xf32> to vector<1x128xf32>
    %123 = vector.broadcast %122 : vector<1x128xf32> to vector<64x128xf32>
    %124 = arith.mulf %123, %89 : vector<64x128xf32>
    %125 = arith.addf %119, %124 : vector<64x128xf32>
    %c8_i32 = arith.constant 8 : i32
    %126 = tpu.dynamic_rotate %125 by %c8_i32 dim 0 : vector<64x128xf32>, i32 -> vector<64x128xf32>
    %127 = vector.broadcast %82 : vector<64x1xf32> to vector<64x128xf32>
    %128 = arith.mulf %126, %127 : vector<64x128xf32>
    %129 = arith.addf %108, %128 : vector<64x128xf32>
    %130 = vector.extract_strided_slice %0 {offsets = [2, 0, 0], sizes = [1, 1, 128], strides = [1, 1, 1]} : vector<3x3x128xf32> to vector<1x1x128xf32>
    %131 = vector.shape_cast %130 : vector<1x1x128xf32> to vector<128xf32>
    %132 = vector.shape_cast %131 : vector<128xf32> to vector<1x128xf32>
    %133 = vector.broadcast %132 : vector<1x128xf32> to vector<64x128xf32>
    %134 = arith.mulf %133, %86 : vector<64x128xf32>
    %135 = vector.extract_strided_slice %0 {offsets = [2, 1, 0], sizes = [1, 1, 128], strides = [1, 1, 1]} : vector<3x3x128xf32> to vector<1x1x128xf32>
    %136 = vector.shape_cast %135 : vector<1x1x128xf32> to vector<128xf32>
    %137 = vector.shape_cast %136 : vector<128xf32> to vector<1x128xf32>
    %138 = vector.broadcast %137 : vector<1x128xf32> to vector<64x128xf32>
    %139 = arith.mulf %138, %79 : vector<64x128xf32>
    %140 = arith.addf %134, %139 : vector<64x128xf32>
    %141 = vector.extract_strided_slice %0 {offsets = [2, 2, 0], sizes = [1, 1, 128], strides = [1, 1, 1]} : vector<3x3x128xf32> to vector<1x1x128xf32>
    %142 = vector.shape_cast %141 : vector<1x1x128xf32> to vector<128xf32>
    %143 = vector.shape_cast %142 : vector<128xf32> to vector<1x128xf32>
    %144 = vector.broadcast %143 : vector<1x128xf32> to vector<64x128xf32>
    %145 = arith.mulf %144, %89 : vector<64x128xf32>
    %146 = arith.addf %140, %145 : vector<64x128xf32>
    %c56_i32 = arith.constant 56 : i32
    %147 = tpu.dynamic_rotate %146 by %c56_i32 dim 0 : vector<64x128xf32>, i32 -> vector<64x128xf32>
    %148 = vector.broadcast %83 : vector<64x1xf32> to vector<64x128xf32>
    %149 = arith.mulf %147, %148 : vector<64x128xf32>
    %150 = arith.addf %129, %149 : vector<64x128xf32>
    %c0_26 = arith.constant 0 : index
    %c256_27 = arith.constant 256 : index
    %c0_28 = arith.constant 0 : index
    %151 = vector.load %arg5[%c0_26, %c256_27, %c0_28] : memref<1x336x128xf32, #tpu.memory_space<vmem>>, vector<1x64x128xf32>
    %152 = vector.shape_cast %151 : vector<1x64x128xf32> to vector<64x128xf32>
    %153 = vector.shape_cast %150 : vector<64x128xf32> to vector<1x64x128xf32>
    tpu.vector_store %arg5[%c0_26, %c256_27, %c0_28], %153 {strides = array<i32>} : memref<1x336x128xf32, #tpu.memory_space<vmem>>, vector<1x64x128xf32>,
    %c0_29 = arith.constant 0 : index
    %c320 = arith.constant 320 : index
    %c0_30 = arith.constant 0 : index
    %154 = vector.load %arg1[%c0_29, %c320, %c0_30] : memref<1x336x128xf32, #tpu.memory_space<vmem>>, vector<1x16x128xf32>
    %155 = vector.shape_cast %154 : vector<1x16x128xf32> to vector<16x128xf32>
    %c320_31 = arith.constant 320 : index
    %c0_32 = arith.constant 0 : index
    %156 = vector.load %arg4[%c320_31, %c0_32] : memref<336x4xf32, #tpu.memory_space<vmem>>, vector<16x1xf32>
    %c320_33 = arith.constant 320 : index
    %c1_34 = arith.constant 1 : index
    %157 = vector.load %arg4[%c320_33, %c1_34] : memref<336x4xf32, #tpu.memory_space<vmem>>, vector<16x1xf32>
    %c320_35 = arith.constant 320 : index
    %c2_36 = arith.constant 2 : index
    %158 = vector.load %arg4[%c320_35, %c2_36] : memref<336x4xf32, #tpu.memory_space<vmem>>, vector<16x1xf32>
    %c320_37 = arith.constant 320 : index
    %c3_38 = arith.constant 3 : index
    %159 = vector.load %arg4[%c320_37, %c3_38] : memref<336x4xf32, #tpu.memory_space<vmem>>, vector<16x1xf32>
    %c1_i32_39 = arith.constant 1 : i32
    %160 = tpu.dynamic_rotate %155 by %c1_i32_39 dim 0 : vector<16x128xf32>, i32 -> vector<16x128xf32>
    %161 = vector.broadcast %156 : vector<16x1xf32> to vector<16x128xf32>
    %162 = arith.mulf %160, %161 : vector<16x128xf32>
    %c15_i32 = arith.constant 15 : i32
    %163 = tpu.dynamic_rotate %155 by %c15_i32 dim 0 : vector<16x128xf32>, i32 -> vector<16x128xf32>
    %164 = vector.broadcast %157 : vector<16x1xf32> to vector<16x128xf32>
    %165 = arith.mulf %163, %164 : vector<16x128xf32>
    %166 = vector.extract_strided_slice %0 {offsets = [1, 0, 0], sizes = [1, 1, 128], strides = [1, 1, 1]} : vector<3x3x128xf32> to vector<1x1x128xf32>
    %167 = vector.shape_cast %166 : vector<1x1x128xf32> to vector<128xf32>
    %168 = vector.shape_cast %167 : vector<128xf32> to vector<1x128xf32>
    %169 = vector.broadcast %168 : vector<1x128xf32> to vector<16x128xf32>
    %170 = arith.mulf %169, %162 : vector<16x128xf32>
    %171 = vector.extract_strided_slice %0 {offsets = [1, 1, 0], sizes = [1, 1, 128], strides = [1, 1, 1]} : vector<3x3x128xf32> to vector<1x1x128xf32>
    %172 = vector.shape_cast %171 : vector<1x1x128xf32> to vector<128xf32>
    %173 = vector.shape_cast %172 : vector<128xf32> to vector<1x128xf32>
    %174 = vector.broadcast %173 : vector<1x128xf32> to vector<16x128xf32>
    %175 = arith.mulf %174, %155 : vector<16x128xf32>
    %176 = arith.addf %170, %175 : vector<16x128xf32>
    %177 = vector.extract_strided_slice %0 {offsets = [1, 2, 0], sizes = [1, 1, 128], strides = [1, 1, 1]} : vector<3x3x128xf32> to vector<1x1x128xf32>
    %178 = vector.shape_cast %177 : vector<1x1x128xf32> to vector<128xf32>
    %179 = vector.shape_cast %178 : vector<128xf32> to vector<1x128xf32>
    %180 = vector.broadcast %179 : vector<1x128xf32> to vector<16x128xf32>
    %181 = arith.mulf %180, %165 : vector<16x128xf32>
    %182 = arith.addf %176, %181 : vector<16x128xf32>
    %183 = vector.broadcast %1 : vector<1x128xf32> to vector<16x128xf32>
    %184 = arith.addf %183, %182 : vector<16x128xf32>
    %185 = vector.extract_strided_slice %0 {offsets = [0, 0, 0], sizes = [1, 1, 128], strides = [1, 1, 1]} : vector<3x3x128xf32> to vector<1x1x128xf32>
    %186 = vector.shape_cast %185 : vector<1x1x128xf32> to vector<128xf32>
    %187 = vector.shape_cast %186 : vector<128xf32> to vector<1x128xf32>
    %188 = vector.broadcast %187 : vector<1x128xf32> to vector<16x128xf32>
    %189 = arith.mulf %188, %162 : vector<16x128xf32>
    %190 = vector.extract_strided_slice %0 {offsets = [0, 1, 0], sizes = [1, 1, 128], strides = [1, 1, 1]} : vector<3x3x128xf32> to vector<1x1x128xf32>
    %191 = vector.shape_cast %190 : vector<1x1x128xf32> to vector<128xf32>
    %192 = vector.shape_cast %191 : vector<128xf32> to vector<1x128xf32>
    %193 = vector.broadcast %192 : vector<1x128xf32> to vector<16x128xf32>
    %194 = arith.mulf %193, %155 : vector<16x128xf32>
    %195 = arith.addf %189, %194 : vector<16x128xf32>
    %196 = vector.extract_strided_slice %0 {offsets = [0, 2, 0], sizes = [1, 1, 128], strides = [1, 1, 1]} : vector<3x3x128xf32> to vector<1x1x128xf32>
    %197 = vector.shape_cast %196 : vector<1x1x128xf32> to vector<128xf32>
    %198 = vector.shape_cast %197 : vector<128xf32> to vector<1x128xf32>
    %199 = vector.broadcast %198 : vector<1x128xf32> to vector<16x128xf32>
    %200 = arith.mulf %199, %165 : vector<16x128xf32>
    %201 = arith.addf %195, %200 : vector<16x128xf32>
    %c4_i32 = arith.constant 4 : i32
    %202 = tpu.dynamic_rotate %201 by %c4_i32 dim 0 : vector<16x128xf32>, i32 -> vector<16x128xf32>
    %203 = vector.broadcast %158 : vector<16x1xf32> to vector<16x128xf32>
    %204 = arith.mulf %202, %203 : vector<16x128xf32>
    %205 = arith.addf %184, %204 : vector<16x128xf32>
    %206 = vector.extract_strided_slice %0 {offsets = [2, 0, 0], sizes = [1, 1, 128], strides = [1, 1, 1]} : vector<3x3x128xf32> to vector<1x1x128xf32>
    %207 = vector.shape_cast %206 : vector<1x1x128xf32> to vector<128xf32>
    %208 = vector.shape_cast %207 : vector<128xf32> to vector<1x128xf32>
    %209 = vector.broadcast %208 : vector<1x128xf32> to vector<16x128xf32>
    %210 = arith.mulf %209, %162 : vector<16x128xf32>
    %211 = vector.extract_strided_slice %0 {offsets = [2, 1, 0], sizes = [1, 1, 128], strides = [1, 1, 1]} : vector<3x3x128xf32> to vector<1x1x128xf32>
    %212 = vector.shape_cast %211 : vector<1x1x128xf32> to vector<128xf32>
    %213 = vector.shape_cast %212 : vector<128xf32> to vector<1x128xf32>
    %214 = vector.broadcast %213 : vector<1x128xf32> to vector<16x128xf32>
    %215 = arith.mulf %214, %155 : vector<16x128xf32>
    %216 = arith.addf %210, %215 : vector<16x128xf32>
    %217 = vector.extract_strided_slice %0 {offsets = [2, 2, 0], sizes = [1, 1, 128], strides = [1, 1, 1]} : vector<3x3x128xf32> to vector<1x1x128xf32>
    %218 = vector.shape_cast %217 : vector<1x1x128xf32> to vector<128xf32>
    %219 = vector.shape_cast %218 : vector<128xf32> to vector<1x128xf32>
    %220 = vector.broadcast %219 : vector<1x128xf32> to vector<16x128xf32>
    %221 = arith.mulf %220, %165 : vector<16x128xf32>
    %222 = arith.addf %216, %221 : vector<16x128xf32>
    %c12_i32 = arith.constant 12 : i32
    %223 = tpu.dynamic_rotate %222 by %c12_i32 dim 0 : vector<16x128xf32>, i32 -> vector<16x128xf32>
    %224 = vector.broadcast %159 : vector<16x1xf32> to vector<16x128xf32>
    %225 = arith.mulf %223, %224 : vector<16x128xf32>
    %226 = arith.addf %205, %225 : vector<16x128xf32>
    %c0_40 = arith.constant 0 : index
    %c320_41 = arith.constant 320 : index
    %c0_42 = arith.constant 0 : index
    %227 = vector.load %arg5[%c0_40, %c320_41, %c0_42] : memref<1x336x128xf32, #tpu.memory_space<vmem>>, vector<1x16x128xf32>
    %228 = vector.shape_cast %227 : vector<1x16x128xf32> to vector<16x128xf32>
    %229 = vector.shape_cast %226 : vector<16x128xf32> to vector<1x16x128xf32>
    tpu.vector_store %arg5[%c0_40, %c320_41, %c0_42], %229 {strides = array<i32>} : memref<1x336x128xf32, #tpu.memory_space<vmem>>, vector<1x16x128xf32>,
    return
  }
  func.func @transform_0(%arg0: i32) -> (i32, i32, i32) {
    %c0_i32 = arith.constant 0 : i32
    %c0_i32_0 = arith.constant 0 : i32
    %c0_i32_1 = arith.constant 0 : i32
    return %arg0, %c0_i32, %c0_i32_0 : i32, i32, i32
  }
  func.func @transform_1(%arg0: i32) -> (i32, i32, i32) {
    %c0_i32 = arith.constant 0 : i32
    %c0_i32_0 = arith.constant 0 : i32
    %c0_i32_1 = arith.constant 0 : i32
    %c0_i32_2 = arith.constant 0 : i32
    return %c0_i32, %c0_i32_0, %c0_i32_1 : i32, i32, i32
  }
  func.func @transform_2(%arg0: i32) -> (i32, i32) {
    %c0_i32 = arith.constant 0 : i32
    %c0_i32_0 = arith.constant 0 : i32
    %c0_i32_1 = arith.constant 0 : i32
    return %c0_i32, %c0_i32_0 : i32, i32
  }
  func.func @transform_3(%arg0: i32) -> (i32, i32) {
    %c0_i32 = arith.constant 0 : i32
    %c0_i32_0 = arith.constant 0 : i32
    %c0_i32_1 = arith.constant 0 : i32
    return %c0_i32, %c0_i32_0 : i32, i32
  }
  func.func @transform_4(%arg0: i32) -> (i32, i32, i32) {
    %c0_i32 = arith.constant 0 : i32
    %c0_i32_0 = arith.constant 0 : i32
    %c0_i32_1 = arith.constant 0 : i32
    return %arg0, %c0_i32, %c0_i32_0 : i32, i32, i32
  }
}

</mosaic_0001>

<llo_original>
// kernel: dwconv_module.1
$region0: #{dwconv_module.1}
  #allocation0 [shape = 'u32[]', space=smem, size = 0x4, offset = 0x4, fixed_abs, tag = 'smem constant byte address 0x4 - core index']
  #allocation1 [shape = 'u32[72,128]{1,0:T(1,128)}', space=vmem, size = 0x9000, scoped, tag = 'internal scratch']
  %s0 = inlined_call_operand.hbm [shape: f32[2,336,128], index: 0, kind: input, shape index: {}]
  %s1 = inlined_call_operand.hbm [shape: f32[3,3,128], index: 1, kind: input, shape index: {}]
  %s2 = inlined_call_operand.vmem [shape: f32[1,128], index: 2, kind: input, shape index: {}]
  %s3 = inlined_call_operand.hbm [shape: f32[336,4], index: 3, kind: input, shape index: {}]
  %s4 = inlined_call_operand.hbm [shape: f32[2,336,128], index: 4, kind: output, shape index: {}]
  %s5 = sld [smem:[#allocation0]]
  $region61: #{dwconv_module.1} parent=0
    _
  %s7 = ssub.s32 1, %s5
  %s8 = scalar_select 0, %s7, %s5
  $region1: #{dwconv_module.1} parent=0
    #allocation2 [shape = 'u8[344064]{0}', space=vmem, size = 0x54000, scoped, tag = 'input window, operand 0']
    #allocation3 [shape = 's32[2]{0}', space=sflag, size = 0x8, scoped, tag = 'scoped memory for dwconv_module.1']
    #allocation4 [shape = 's32[2]{0}', space=sflag, size = 0x8, scoped, tag = 'scoped memory for dwconv_module.1']
    #allocation5 [shape = 'u8[6144]{0}', space=vmem, size = 0x1800, scoped, tag = 'input window, operand 1, single buffered']
    #allocation6 [shape = 's32[1]{0}', space=sflag, size = 0x4, scoped, tag = 'scoped memory for dwconv_module.1']
    #allocation7 [shape = 'u8[172032]{0}', space=vmem, size = 0x2a000, scoped, tag = 'input window, operand 3, single buffered']
    #allocation8 [shape = 'u8[344064]{0}', space=vmem, size = 0x54000, scoped, tag = 'output window, operand 0']
    %9 = vsyncpa [#allocation3], 0
    %s10 = scalar_lea.sflag [#allocation3], 1
    %11 = vsyncpa %s10, 0
    %12 = vsyncpa [#allocation6], 0
    %13 = vsyncpa [#allocation4], 0
    %s14 = scalar_lea.sflag [#allocation4], 1
    %15 = vsyncpa %s14, 0
    loop: start=0, step=1, limit=4
    $region2: #{dwconv_module.1} parent=1 // loop_pre_header
      _
    $region3: #{dwconv_module.1} parent=1 // loop_header
      %s17 = sphi 0, %s21
      %p18 = scmp.ge.s32.totalorder %s17, 4
      %s27 = sphi 0, %s29
      %s30 = sphi 0, %s27
      %s31 = sphi 0, %s30
      %s47 = sphi 0, %s31
      %s51 = sphi 0, %s51
      %s53 = sphi 0, %s51
      %s54 = sphi 0, %s53
      %s68 = sphi 0, %s54
      %s72 = sphi 0, %s72
      %s74 = sphi 0, %s72
      %s75 = sphi 0, %s74
      %s89 = sphi 0, %s75
      %s93 = sphi 0, %s93
      %s95 = sphi 0, %s93
      %s96 = sphi 0, %s95
      %s110 = sphi 0, %s96
      %s116 = sphi 0, %s118
      %s119 = sphi 0, %s116
      %s120 = sphi 0, %s119
      %s136 = sphi 0, %s120
    $region4: #{dwconv_module.1} parent=1 // loop_header_branch
      %20 = sbr.rel (%p18) target = $region8
    $region5: #{dwconv_module.1} parent=1 // loop_body
      %s22 = ssub.s32 %s17, 1
      %s23 = ssub.s32 %s17, 2
      %s24 = sadd.s32 %s17, 1
      %s25 = ssub.s32 %s17, %s24
      %p26 = scmp.eq.s32.totalorder %s25, 0
      %s28 = sadd.s32 %s27, 1
      %s29 = scalar_select %p26, %s27, %s28
      %p32 = pneg %p26
      %p33 = scmp.eq.s32.totalorder %s17, 1
      %p34 = por %p32, %p33
      %p35 = scmp.ne.s32.totalorder %s27, %s30
      %p36 = scmp.eq.s32.totalorder %s17, 0
      %p37 = por %p35, %p36
      %p38 = scmp.ne.s32.totalorder %s27, %s30
      %p39 = scmp.eq.s32.totalorder %s22, 1
      %p40 = por %p38, %p39
      %p41 = scmp.ne.s32.totalorder %s30, %s31
      %p42 = scmp.eq.s32.totalorder %s22, 0
      %p43 = por %p41, %p42
      %p44 = scmp.ne.s32.totalorder %s30, %s31
      %p45 = scmp.eq.s32.totalorder %s23, 1
      %p46 = por %p44, %p45
      %p48 = scmp.ne.s32.totalorder %s31, %s47
      %p49 = scmp.eq.s32.totalorder %s23, 0
      %p50 = por %p48, %p49
      %s52 = sadd.s32 %s51, 1
      %p55 = scmp.eq.s32.totalorder %s17, 1
      %p56 = scmp.ne.s32.totalorder %s51, %s53
      %p57 = scmp.eq.s32.totalorder %s17, 0
      %p58 = por %p56, %p57
      %p59 = scmp.ne.s32.totalorder %s51, %s53
      %p60 = scmp.eq.s32.totalorder %s22, 1
      %p61 = por %p59, %p60
      %p62 = scmp.ne.s32.totalorder %s53, %s54
      %p63 = scmp.eq.s32.totalorder %s22, 0
      %p64 = por %p62, %p63
      %p65 = scmp.ne.s32.totalorder %s53, %s54
      %p66 = scmp.eq.s32.totalorder %s23, 1
      %p67 = por %p65, %p66
      %p69 = scmp.ne.s32.totalorder %s54, %s68
      %p70 = scmp.eq.s32.totalorder %s23, 0
      %p71 = por %p69, %p70
      %s73 = sadd.s32 %s72, 1
      %p76 = scmp.eq.s32.totalorder %s17, 1
      %p77 = scmp.ne.s32.totalorder %s72, %s74
      %p78 = scmp.eq.s32.totalorder %s17, 0
      %p79 = por %p77, %p78
      %p80 = scmp.ne.s32.totalorder %s72, %s74
      %p81 = scmp.eq.s32.totalorder %s22, 1
      %p82 = por %p80, %p81
      %p83 = scmp.ne.s32.totalorder %s74, %s75
      %p84 = scmp.eq.s32.totalorder %s22, 0
      %p85 = por %p83, %p84
      %p86 = scmp.ne.s32.totalorder %s74, %s75
      %p87 = scmp.eq.s32.totalorder %s23, 1
      %p88 = por %p86, %p87
      %p90 = scmp.ne.s32.totalorder %s75, %s89
      %p91 = scmp.eq.s32.totalorder %s23, 0
      %p92 = por %p90, %p91
      %s94 = sadd.s32 %s93, 1
      %p97 = scmp.eq.s32.totalorder %s17, 1
      %p98 = scmp.ne.s32.totalorder %s93, %s95
      %p99 = scmp.eq.s32.totalorder %s17, 0
      %p100 = por %p98, %p99
      %p101 = scmp.ne.s32.totalorder %s93, %s95
      %p102 = scmp.eq.s32.totalorder %s22, 1
      %p103 = por %p101, %p102
      %p104 = scmp.ne.s32.totalorder %s95, %s96
      %p105 = scmp.eq.s32.totalorder %s22, 0
      %p106 = por %p104, %p105
      %p107 = scmp.ne.s32.totalorder %s95, %s96
      %p108 = scmp.eq.s32.totalorder %s23, 1
      %p109 = por %p107, %p108
      %p111 = scmp.ne.s32.totalorder %s96, %s110
      %p112 = scmp.eq.s32.totalorder %s23, 0
      %p113 = por %p111, %p112
      %s114 = ssub.s32 %s17, %s24
      %p115 = scmp.eq.s32.totalorder %s114, 0
      %s117 = sadd.s32 %s116, 1
      %s118 = scalar_select %p115, %s116, %s117
      %p121 = pneg %p115
      %p122 = scmp.eq.s32.totalorder %s17, 1
      %p123 = por %p121, %p122
      %p124 = scmp.ne.s32.totalorder %s116, %s119
      %p125 = scmp.eq.s32.totalorder %s17, 0
      %p126 = por %p124, %p125
      %p127 = scmp.ne.s32.totalorder %s116, %s119
      %p128 = scmp.eq.s32.totalorder %s22, 1
      %p129 = por %p127, %p128
      %p130 = scmp.ne.s32.totalorder %s119, %s120
      %p131 = scmp.eq.s32.totalorder %s22, 0
      %p132 = por %p130, %p131
      %p133 = scmp.ne.s32.totalorder %s119, %s120
      %p134 = scmp.eq.s32.totalorder %s23, 1
      %p135 = por %p133, %p134
      %p137 = scmp.ne.s32.totalorder %s120, %s136
      %p138 = scmp.eq.s32.totalorder %s23, 0
      %p139 = por %p137, %p138
      %p140 = scmp.le.s32.totalorder 1, %s17
      %p141 = scmp.lt.s32.totalorder %s17, 3
      %p142 = pnand %p140, %p141
      %p143 = pneg %p142
      // Predicated region
      $region9: #{dwconv_module.1} parent=5 // pred_check
        _
      $region10: #{dwconv_module.1} parent=5 // pred_check_branch
        %145 = sbr.rel (%p142) target = $region12
      $region11: #{dwconv_module.1} parent=5 // pred_region
        %s146 = ssub.s32 %s17, 1
        // Predicated region
        $region13: #{dwconv_module.1} parent=11 // pred_check
          %p147 = pneg %p64
        $region14: #{dwconv_module.1} parent=11 // pred_check_branch
          %149 = sbr.rel (%p147) target = $region16
        $region15: #{dwconv_module.1} parent=11 // pred_region
          %151 = vsyncadd [#allocation6], 0
          %s152 = sshll.u32 %s1, 4
          %s153 = int_to_ptr.hbm [resolvable:$true] %s152
          %s154 = sshll.u32 [#allocation5], 4
          %s155 = int_to_ptr.vmem [resolvable:$true] %s154
          %160 = dma.hbm_to_vmem [thread:$0]  %s153, 192, %s155, [#allocation6], 64, 64, 4
        $region16: #{dwconv_module.1} parent=11 // pred_fallthru
          _
        // Predicated region
        $region17: #{dwconv_module.1} parent=11 // pred_check
          %p161 = pneg %p85
        $region18: #{dwconv_module.1} parent=11 // pred_check_branch
          %163 = sbr.rel (%p161) target = $region20
        $region19: #{dwconv_module.1} parent=11 // pred_region
          _
        $region20: #{dwconv_module.1} parent=11 // pred_fallthru
          _
        // Predicated region
        $region21: #{dwconv_module.1} parent=11 // pred_check
          %p164 = pneg %p106
        $region22: #{dwconv_module.1} parent=11 // pred_check_branch
          %166 = sbr.rel (%p164) target = $region24
        $region23: #{dwconv_module.1} parent=11 // pred_region
          %168 = vsyncadd [#allocation6], 0
          %s169 = sshll.u32 %s3, 4
          %s170 = int_to_ptr.hbm [resolvable:$true] %s169
          %s171 = sshll.u32 [#allocation7], 4
          %s172 = int_to_ptr.vmem [resolvable:$true] %s171
          %177 = dma.hbm_to_vmem [thread:$0]  %s170, 5376, %s172, [#allocation6], 128, 128, 8
        $region24: #{dwconv_module.1} parent=11 // pred_fallthru
          _
      $region12: #{dwconv_module.1} parent=5 // pred_fallthru
        _
      %p178 = scmp.lt.s32.totalorder %s17, 2
      // Predicated region
      $region25: #{dwconv_module.1} parent=5 // pred_check
        %p179 = pneg %p178
      $region26: #{dwconv_module.1} parent=5 // pred_check_branch
        %181 = sbr.rel (%p179) target = $region28
      $region27: #{dwconv_module.1} parent=5 // pred_region
        // Predicated region
        $region29: #{dwconv_module.1} parent=27 // pred_check
          %p182 = pneg %p37
        $region30: #{dwconv_module.1} parent=27 // pred_check_branch
          %184 = sbr.rel (%p182) target = $region32
        $region31: #{dwconv_module.1} parent=27 // pred_region
          %s185 = sand.u32 %s27, 1
          %s186 = scalar_lea.sflag [#allocation3], %s185
          %s187 = sand.u32 %s27, 1
          %s188 = smul.addr %s187, 336
          %s189 = scalar_lea.vmem [#allocation2], %s188
          %191 = vsyncadd %s186, 0
          %s192 = smul.addr %s17, 42
          %s193 = smul.addr %s192, 8
          %s194 = scalar_lea.hbm %s0, %s193
          %s195 = sshll.u32 %s194, 4
          %s196 = int_to_ptr.hbm [resolvable:$true] %s195
          %s197 = sshll.u32 %s189, 4
          %s198 = int_to_ptr.vmem [resolvable:$true] %s197
          %203 = dma.hbm_to_vmem [thread:$0]  %s196, 5376, %s198, %s186, 128, 128, 8
        $region32: #{dwconv_module.1} parent=27 // pred_fallthru
          _
      $region28: #{dwconv_module.1} parent=5 // pred_fallthru
        _
      %p204 = scmp.le.s32.totalorder 1, %s17
      %p205 = scmp.lt.s32.totalorder %s17, 3
      %p206 = pnand %p204, %p205
      %p207 = pneg %p206
      // Predicated region
      $region33: #{dwconv_module.1} parent=5 // pred_check
        _
      $region34: #{dwconv_module.1} parent=5 // pred_check_branch
        %209 = sbr.rel (%p206) target = $region36
      $region35: #{dwconv_module.1} parent=5 // pred_region
        %s210 = ssub.s32 %s17, 1
        %s211 = sand.u32 %s30, 1
        %s212 = scalar_lea.sflag [#allocation3], %s211
        %s213 = sand.u32 %s30, 1
        %s214 = smul.addr %s213, 336
        %s215 = scalar_lea.vmem [#allocation2], %s214
        // Predicated region
        $region37: #{dwconv_module.1} parent=35 // pred_check
          %p216 = pneg %p43
        $region38: #{dwconv_module.1} parent=35 // pred_check_branch
          %218 = sbr.rel (%p216) target = $region40
        $region39: #{dwconv_module.1} parent=35 // pred_region
          %220 = dma.done %s212, 5376
        $region40: #{dwconv_module.1} parent=35 // pred_fallthru
          _
        // Predicated region
        $region41: #{dwconv_module.1} parent=35 // pred_check
          %p221 = pneg %p64
        $region42: #{dwconv_module.1} parent=35 // pred_check_branch
          %223 = sbr.rel (%p221) target = $region44
        $region43: #{dwconv_module.1} parent=35 // pred_region
          %225 = dma.done [#allocation6], 192
        $region44: #{dwconv_module.1} parent=35 // pred_fallthru
          _
        // Predicated region
        $region45: #{dwconv_module.1} parent=35 // pred_check
          %p226 = pneg %p106
        $region46: #{dwconv_module.1} parent=35 // pred_check_branch
          %228 = sbr.rel (%p226) target = $region48
        $region47: #{dwconv_module.1} parent=35 // pred_region
          %230 = dma.done [#allocation6], 5376
        $region48: #{dwconv_module.1} parent=35 // pred_fallthru
          _
        %s231 = sand.u32 %s30, 1
        %s232 = scalar_lea.sflag [#allocation3], %s231
        %s233 = sand.u32 %s30, 1
        %s234 = smul.addr %s233, 336
        %s235 = scalar_lea.vmem [#allocation2], %s234
        %p236 = pneg %p43
        %p237 = pneg %p40
        %p238 = pneg %p64
        %p239 = pneg %p61
        %p240 = pneg %p85
        %p241 = pneg %p82
        %p242 = pneg %p106
        %p243 = pneg %p103
        %p244 = pneg %p132
        %p245 = pneg %p129
        %s246 = sand.u32 %s119, 1
        %s247 = scalar_lea.sflag [#allocation4], %s246
        %s248 = sand.u32 %s119, 1
        %s249 = smul.addr %s248, 336
        %s250 = scalar_lea.vmem [#allocation8], %s249
        %v251 = vld [vmem:[#allocation5] sm:$0x7]
        %v252 = vld [vmem:[#allocation5 + $0x4] sm:$0x7]
        %v253 = vld [vmem:[#allocation5 + $0x8] sm:$0x7]
        %v254 = vld [vmem:[%s2] sm:$0x1]
        %v255 = vld [vmem:[%s215] sm:$0xff]
        %v256 = vld [vmem:[%s215 + $0x8] sm:$0xff]
        %v257 = vld [vmem:[%s215 + $0x10] sm:$0xff]
        %v258 = vld [vmem:[%s215 + $0x18] sm:$0xff]
        %v259 = vld [vmem:[%s215 + $0x20] sm:$0xff]
        %v260 = vld [vmem:[%s215 + $0x28] sm:$0xff]
        %v261 = vld [vmem:[%s215 + $0x30] sm:$0xff]
        %v262 = vld [vmem:[%s215 + $0x38] sm:$0xff]
        %v263 = vld [vmem:[%s215 + $0x40] sm:$0xff]
        %v264 = vld [vmem:[%s215 + $0x48] sm:$0xff]
        %v265 = vld [vmem:[%s215 + $0x50] sm:$0xff]
        %v266 = vld [vmem:[%s215 + $0x58] sm:$0xff]
        %v267 = vld [vmem:[%s215 + $0x60] sm:$0xff]
        %v268 = vld [vmem:[%s215 + $0x68] sm:$0xff]
        %v269 = vld [vmem:[%s215 + $0x70] sm:$0xff]
        %v270 = vld [vmem:[%s215 + $0x78] sm:$0xff]
        %v271 = vld [vmem:[%s215 + $0x80] sm:$0xff]
        %v272 = vld [vmem:[%s215 + $0x88] sm:$0xff]
        %v273 = vld [vmem:[%s215 + $0x90] sm:$0xff]
        %v274 = vld [vmem:[%s215 + $0x98] sm:$0xff]
        %v275 = vld [vmem:[%s215 + $0xa0] sm:$0xff]
        %v276 = vld [vmem:[%s215 + $0xa8] sm:$0xff]
        %v277 = vld [vmem:[%s215 + $0xb0] sm:$0xff]
        %v278 = vld [vmem:[%s215 + $0xb8] sm:$0xff]
        %v279 = vld [vmem:[%s215 + $0xc0] sm:$0xff]
        %v280 = vld [vmem:[%s215 + $0xc8] sm:$0xff]
        %v281 = vld [vmem:[%s215 + $0xd0] sm:$0xff]
        %v282 = vld [vmem:[%s215 + $0xd8] sm:$0xff]
        %v283 = vld [vmem:[%s215 + $0xe0] sm:$0xff]
        %v284 = vld [vmem:[%s215 + $0xe8] sm:$0xff]
        %v285 = vld [vmem:[%s215 + $0xf0] sm:$0xff]
        %v286 = vld [vmem:[%s215 + $0xf8] sm:$0xff]
        %v287 = vld [vmem:[#allocation7] sm:$0xff]
        %v288 = vld [vmem:[#allocation7 + $0x8] sm:$0xff]
        %v289 = vld [vmem:[#allocation7 + $0x10] sm:$0xff]
        %v290 = vld [vmem:[#allocation7 + $0x18] sm:$0xff]
        %v291 = vld [vmem:[#allocation7 + $0x20] sm:$0xff]
        %v292 = vld [vmem:[#allocation7 + $0x28] sm:$0xff]
        %v293 = vld [vmem:[#allocation7 + $0x30] sm:$0xff]
        %v294 = vld [vmem:[#allocation7 + $0x38] sm:$0xff]
        %v295 = vld [vmem:[#allocation7 + $0x40] sm:$0xff]
        %v296 = vld [vmem:[#allocation7 + $0x48] sm:$0xff]
        %v297 = vld [vmem:[#allocation7 + $0x50] sm:$0xff]
        %v298 = vld [vmem:[#allocation7 + $0x58] sm:$0xff]
        %v299 = vld [vmem:[#allocation7 + $0x60] sm:$0xff]
        %v300 = vld [vmem:[#allocation7 + $0x68] sm:$0xff]
        %v301 = vld [vmem:[#allocation7 + $0x70] sm:$0xff]
        %v302 = vld [vmem:[#allocation7 + $0x78] sm:$0xff]
        %v303 = vld [vmem:[#allocation7 + $0x80] sm:$0xff]
        %v304 = vld [vmem:[#allocation7 + $0x88] sm:$0xff]
        %v305 = vld [vmem:[#allocation7 + $0x90] sm:$0xff]
        %v306 = vld [vmem:[#allocation7 + $0x98] sm:$0xff]
        %v307 = vld [vmem:[#allocation7 + $0xa0] sm:$0xff]
        %v308 = vld [vmem:[#allocation7 + $0xa8] sm:$0xff]
        %v309 = vld [vmem:[#allocation7 + $0xb0] sm:$0xff]
        %v310 = vld [vmem:[#allocation7 + $0xb8] sm:$0xff]
        %v311 = vld [vmem:[#allocation7 + $0xc0] sm:$0xff]
        %v312 = vld [vmem:[#allocation7 + $0xc8] sm:$0xff]
        %v313 = vld [vmem:[#allocation7 + $0xd0] sm:$0xff]
        %v314 = vld [vmem:[#allocation7 + $0xd8] sm:$0xff]
        %v315 = vld [vmem:[#allocation7 + $0xe0] sm:$0xff]
        %v316 = vld [vmem:[#allocation7 + $0xe8] sm:$0xff]
        %v317 = vld [vmem:[#allocation7 + $0xf0] sm:$0xff]
        %v318 = vld [vmem:[#allocation7 + $0xf8] sm:$0xff]
        %v319 = vrot.slane %v255, 7
        %v320 = vrot.slane %v256, 7
        %v321 = vrot.slane %v257, 7
        %v322 = vrot.slane %v258, 7
        %v323 = vrot.slane %v259, 7
        %v324 = vrot.slane %v260, 7
        %v325 = vrot.slane %v261, 7
        %v326 = vrot.slane %v262, 7
        %v327 = vrot.slane %v263, 7
        %v328 = vrot.slane %v264, 7
        %v329 = vrot.slane %v265, 7
        %v330 = vrot.slane %v266, 7
        %v331 = vrot.slane %v267, 7
        %v332 = vrot.slane %v268, 7
        %v333 = vrot.slane %v269, 7
        %v334 = vrot.slane %v270, 7
        %v335 = vrot.slane %v271, 7
        %v336 = vrot.slane %v272, 7
        %v337 = vrot.slane %v273, 7
        %v338 = vrot.slane %v274, 7
        %v339 = vrot.slane %v275, 7
        %v340 = vrot.slane %v276, 7
        %v341 = vrot.slane %v277, 7
        %v342 = vrot.slane %v278, 7
        %v343 = vrot.slane %v279, 7
        %v344 = vrot.slane %v280, 7
        %v345 = vrot.slane %v281, 7
        %v346 = vrot.slane %v282, 7
        %v347 = vrot.slane %v283, 7
        %v348 = vrot.slane %v284, 7
        %v349 = vrot.slane %v285, 7
        %v350 = vrot.slane %v286, 7
        %v351 = vlaneseq
        %v352 = vshrl.u32 %v351, 7
        %vm353 = vcmp.lt.s32.totalorder %v352, 1
        %v354 = vsel %vm353, %v349, %v350
        %v355 = vsel %vm353, %v348, %v349
        %v356 = vsel %vm353, %v347, %v348
        %v357 = vsel %vm353, %v346, %v347
        %v358 = vsel %vm353, %v345, %v346
        %v359 = vsel %vm353, %v344, %v345
        %v360 = vsel %vm353, %v343, %v344
        %v361 = vsel %vm353, %v342, %v343
        %v362 = vsel %vm353, %v341, %v342
        %v363 = vsel %vm353, %v340, %v341
        %v364 = vsel %vm353, %v339, %v340
        %v365 = vsel %vm353, %v338, %v339
        %v366 = vsel %vm353, %v337, %v338
        %v367 = vsel %vm353, %v336, %v337
        %v368 = vsel %vm353, %v335, %v336
        %v369 = vsel %vm353, %v334, %v335
        %v370 = vsel %vm353, %v333, %v334
        %v371 = vsel %vm353, %v332, %v333
        %v372 = vsel %vm353, %v331, %v332
        %v373 = vsel %vm353, %v330, %v331
        %v374 = vsel %vm353, %v329, %v330
        %v375 = vsel %vm353, %v328, %v329
        %v376 = vsel %vm353, %v327, %v328
        %v377 = vsel %vm353, %v326, %v327
        %v378 = vsel %vm353, %v325, %v326
        %v379 = vsel %vm353, %v324, %v325
        %v380 = vsel %vm353, %v323, %v324
        %v381 = vsel %vm353, %v322, %v323
        %v382 = vsel %vm353, %v321, %v322
        %v383 = vsel %vm353, %v320, %v321
        %v384 = vsel %vm353, %v319, %v320
        %v385 = vsel %vm353, %v350, %v319
        %387 = vset.pattern.permute.xlu0 0
        %388 = vperm.xlu0 %387, %v287
        %v389 = vpop.permute.xlu0 %388
        %392 = vset.pattern.permute.xlu0 0
        %393 = vperm.xlu0 %392, %v288
        %v394 = vpop.permute.xlu0 %393
        %397 = vset.pattern.permute.xlu0 0
        %398 = vperm.xlu0 %397, %v289
        %v399 = vpop.permute.xlu0 %398
        %402 = vset.pattern.permute.xlu0 0
        %403 = vperm.xlu0 %402, %v290
        %v404 = vpop.permute.xlu0 %403
        %407 = vset.pattern.permute.xlu0 0
        %408 = vperm.xlu0 %407, %v291
        %v409 = vpop.permute.xlu0 %408
        %412 = vset.pattern.permute.xlu0 0
        %413 = vperm.xlu0 %412, %v292
        %v414 = vpop.permute.xlu0 %413
        %417 = vset.pattern.permute.xlu0 0
        %418 = vperm.xlu0 %417, %v293
        %v419 = vpop.permute.xlu0 %418
        %422 = vset.pattern.permute.xlu0 0
        %423 = vperm.xlu0 %422, %v294
        %v424 = vpop.permute.xlu0 %423
        %427 = vset.pattern.permute.xlu0 0
        %428 = vperm.xlu0 %427, %v295
        %v429 = vpop.permute.xlu0 %428
        %432 = vset.pattern.permute.xlu0 0
        %433 = vperm.xlu0 %432, %v296
        %v434 = vpop.permute.xlu0 %433
        %437 = vset.pattern.permute.xlu0 0
        %438 = vperm.xlu0 %437, %v297
        %v439 = vpop.permute.xlu0 %438
        %442 = vset.pattern.permute.xlu0 0
        %443 = vperm.xlu0 %442, %v298
        %v444 = vpop.permute.xlu0 %443
        %447 = vset.pattern.permute.xlu0 0
        %448 = vperm.xlu0 %447, %v299
        %v449 = vpop.permute.xlu0 %448
        %452 = vset.pattern.permute.xlu0 0
        %453 = vperm.xlu0 %452, %v300
        %v454 = vpop.permute.xlu0 %453
        %457 = vset.pattern.permute.xlu0 0
        %458 = vperm.xlu0 %457, %v301
        %v459 = vpop.permute.xlu0 %458
        %462 = vset.pattern.permute.xlu0 0
        %463 = vperm.xlu0 %462, %v302
        %v464 = vpop.permute.xlu0 %463
        %467 = vset.pattern.permute.xlu0 0
        %468 = vperm.xlu0 %467, %v303
        %v469 = vpop.permute.xlu0 %468
        %472 = vset.pattern.permute.xlu0 0
        %473 = vperm.xlu0 %472, %v304
        %v474 = vpop.permute.xlu0 %473
        %477 = vset.pattern.permute.xlu0 0
        %478 = vperm.xlu0 %477, %v305
        %v479 = vpop.permute.xlu0 %478
        %482 = vset.pattern.permute.xlu0 0
        %483 = vperm.xlu0 %482, %v306
        %v484 = vpop.permute.xlu0 %483
        %487 = vset.pattern.permute.xlu0 0
        %488 = vperm.xlu0 %487, %v307
        %v489 = vpop.permute.xlu0 %488
        %492 = vset.pattern.permute.xlu0 0
        %493 = vperm.xlu0 %492, %v308
        %v494 = vpop.permute.xlu0 %493
        %497 = vset.pattern.permute.xlu0 0
        %498 = vperm.xlu0 %497, %v309
        %v499 = vpop.permute.xlu0 %498
        %502 = vset.pattern.permute.xlu0 0
        %503 = vperm.xlu0 %502, %v310
        %v504 = vpop.permute.xlu0 %503
        %507 = vset.pattern.permute.xlu0 0
        %508 = vperm.xlu0 %507, %v311
        %v509 = vpop.permute.xlu0 %508
        %512 = vset.pattern.permute.xlu0 0
        %513 = vperm.xlu0 %512, %v312
        %v514 = vpop.permute.xlu0 %513
        %517 = vset.pattern.permute.xlu0 0
        %518 = vperm.xlu0 %517, %v313
        %v519 = vpop.permute.xlu0 %518
        %522 = vset.pattern.permute.xlu0 0
        %523 = vperm.xlu0 %522, %v314
        %v524 = vpop.permute.xlu0 %523
        %527 = vset.pattern.permute.xlu0 0
        %528 = vperm.xlu0 %527, %v315
        %v529 = vpop.permute.xlu0 %528
        %532 = vset.pattern.permute.xlu0 0
        %533 = vperm.xlu0 %532, %v316
        %v534 = vpop.permute.xlu0 %533
        %537 = vset.pattern.permute.xlu0 0
        %538 = vperm.xlu0 %537, %v317
        %v539 = vpop.permute.xlu0 %538
        %542 = vset.pattern.permute.xlu0 0
        %543 = vperm.xlu0 %542, %v318
        %v544 = vpop.permute.xlu0 %543
        %v546 = vmul.f32 %v385, %v389
        %v547 = vmul.f32 %v384, %v394
        %v548 = vmul.f32 %v383, %v399
        %v549 = vmul.f32 %v382, %v404
        %v550 = vmul.f32 %v381, %v409
        %v551 = vmul.f32 %v380, %v414
        %v552 = vmul.f32 %v379, %v419
        %v553 = vmul.f32 %v378, %v424
        %v554 = vmul.f32 %v377, %v429
        %v555 = vmul.f32 %v376, %v434
        %v556 = vmul.f32 %v375, %v439
        %v557 = vmul.f32 %v374, %v444
        %v558 = vmul.f32 %v373, %v449
        %v559 = vmul.f32 %v372, %v454
        %v560 = vmul.f32 %v371, %v459
        %v561 = vmul.f32 %v370, %v464
        %v562 = vmul.f32 %v369, %v469
        %v563 = vmul.f32 %v368, %v474
        %v564 = vmul.f32 %v367, %v479
        %v565 = vmul.f32 %v366, %v484
        %v566 = vmul.f32 %v365, %v489
        %v567 = vmul.f32 %v364, %v494
        %v568 = vmul.f32 %v363, %v499
        %v569 = vmul.f32 %v362, %v504
        %v570 = vmul.f32 %v361, %v509
        %v571 = vmul.f32 %v360, %v514
        %v572 = vmul.f32 %v359, %v519
        %v573 = vmul.f32 %v358, %v524
        %v574 = vmul.f32 %v357, %v529
        %v575 = vmul.f32 %v356, %v534
        %v576 = vmul.f32 %v355, %v539
        %v577 = vmul.f32 %v354, %v544
        %v578 = vrot.slane %v255, 1
        %v579 = vrot.slane %v256, 1
        %v580 = vrot.slane %v257, 1
        %v581 = vrot.slane %v258, 1
        %v582 = vrot.slane %v259, 1
        %v583 = vrot.slane %v260, 1
        %v584 = vrot.slane %v261, 1
        %v585 = vrot.slane %v262, 1
        %v586 = vrot.slane %v263, 1
        %v587 = vrot.slane %v264, 1
        %v588 = vrot.slane %v265, 1
        %v589 = vrot.slane %v266, 1
        %v590 = vrot.slane %v267, 1
        %v591 = vrot.slane %v268, 1
        %v592 = vrot.slane %v269, 1
        %v593 = vrot.slane %v270, 1
        %v594 = vrot.slane %v271, 1
        %v595 = vrot.slane %v272, 1
        %v596 = vrot.slane %v273, 1
        %v597 = vrot.slane %v274, 1
        %v598 = vrot.slane %v275, 1
        %v599 = vrot.slane %v276, 1
        %v600 = vrot.slane %v277, 1
        %v601 = vrot.slane %v278, 1
        %v602 = vrot.slane %v279, 1
        %v603 = vrot.slane %v280, 1
        %v604 = vrot.slane %v281, 1
        %v605 = vrot.slane %v282, 1
        %v606 = vrot.slane %v283, 1
        %v607 = vrot.slane %v284, 1
        %v608 = vrot.slane %v285, 1
        %v609 = vrot.slane %v286, 1
        %vm610 = vcmp.lt.s32.totalorder %v352, 7
        %v611 = vsel %vm610, %v608, %v609
        %v612 = vsel %vm610, %v607, %v608
        %v613 = vsel %vm610, %v606, %v607
        %v614 = vsel %vm610, %v605, %v606
        %v615 = vsel %vm610, %v604, %v605
        %v616 = vsel %vm610, %v603, %v604
        %v617 = vsel %vm610, %v602, %v603
        %v618 = vsel %vm610, %v601, %v602
        %v619 = vsel %vm610, %v600, %v601
        %v620 = vsel %vm610, %v599, %v600
        %v621 = vsel %vm610, %v598, %v599
        %v622 = vsel %vm610, %v597, %v598
        %v623 = vsel %vm610, %v596, %v597
        %v624 = vsel %vm610, %v595, %v596
        %v625 = vsel %vm610, %v594, %v595
        %v626 = vsel %vm610, %v593, %v594
        %v627 = vsel %vm610, %v592, %v593
        %v628 = vsel %vm610, %v591, %v592
        %v629 = vsel %vm610, %v590, %v591
        %v630 = vsel %vm610, %v589, %v590
        %v631 = vsel %vm610, %v588, %v589
        %v632 = vsel %vm610, %v587, %v588
        %v633 = vsel %vm610, %v586, %v587
        %v634 = vsel %vm610, %v585, %v586
        %v635 = vsel %vm610, %v584, %v585
        %v636 = vsel %vm610, %v583, %v584
        %v637 = vsel %vm610, %v582, %v583
        %v638 = vsel %vm610, %v581, %v582
        %v639 = vsel %vm610, %v580, %v581
        %v640 = vsel %vm610, %v579, %v580
        %v641 = vsel %vm610, %v578, %v579
        %v642 = vsel %vm610, %v609, %v578
        %643 = vset.pattern.permute.xlu0 1
        %644 = vperm.xlu0 %643, %v287
        %v645 = vpop.permute.xlu0 %644
        %647 = vset.pattern.permute.xlu0 1
        %648 = vperm.xlu0 %647, %v288
        %v649 = vpop.permute.xlu0 %648
        %651 = vset.pattern.permute.xlu0 1
        %652 = vperm.xlu0 %651, %v289
        %v653 = vpop.permute.xlu0 %652
        %655 = vset.pattern.permute.xlu0 1
        %656 = vperm.xlu0 %655, %v290
        %v657 = vpop.permute.xlu0 %656
        %659 = vset.pattern.permute.xlu0 1
        %660 = vperm.xlu0 %659, %v291
        %v661 = vpop.permute.xlu0 %660
        %663 = vset.pattern.permute.xlu0 1
        %664 = vperm.xlu0 %663, %v292
        %v665 = vpop.permute.xlu0 %664
        %667 = vset.pattern.permute.xlu0 1
        %668 = vperm.xlu0 %667, %v293
        %v669 = vpop.permute.xlu0 %668
        %671 = vset.pattern.permute.xlu0 1
        %672 = vperm.xlu0 %671, %v294
        %v673 = vpop.permute.xlu0 %672
        %675 = vset.pattern.permute.xlu0 1
        %676 = vperm.xlu0 %675, %v295
        %v677 = vpop.permute.xlu0 %676
        %679 = vset.pattern.permute.xlu0 1
        %680 = vperm.xlu0 %679, %v296
        %v681 = vpop.permute.xlu0 %680
        %683 = vset.pattern.permute.xlu0 1
        %684 = vperm.xlu0 %683, %v297
        %v685 = vpop.permute.xlu0 %684
        %687 = vset.pattern.permute.xlu0 1
        %688 = vperm.xlu0 %687, %v298
        %v689 = vpop.permute.xlu0 %688
        %691 = vset.pattern.permute.xlu0 1
        %692 = vperm.xlu0 %691, %v299
        %v693 = vpop.permute.xlu0 %692
        %695 = vset.pattern.permute.xlu0 1
        %696 = vperm.xlu0 %695, %v300
        %v697 = vpop.permute.xlu0 %696
        %699 = vset.pattern.permute.xlu0 1
        %700 = vperm.xlu0 %699, %v301
        %v701 = vpop.permute.xlu0 %700
        %703 = vset.pattern.permute.xlu0 1
        %704 = vperm.xlu0 %703, %v302
        %v705 = vpop.permute.xlu0 %704
        %707 = vset.pattern.permute.xlu0 1
        %708 = vperm.xlu0 %707, %v303
        %v709 = vpop.permute.xlu0 %708
        %711 = vset.pattern.permute.xlu0 1
        %712 = vperm.xlu0 %711, %v304
        %v713 = vpop.permute.xlu0 %712
        %715 = vset.pattern.permute.xlu0 1
        %716 = vperm.xlu0 %715, %v305
        %v717 = vpop.permute.xlu0 %716
        %719 = vset.pattern.permute.xlu0 1
        %720 = vperm.xlu0 %719, %v306
        %v721 = vpop.permute.xlu0 %720
        %723 = vset.pattern.permute.xlu0 1
        %724 = vperm.xlu0 %723, %v307
        %v725 = vpop.permute.xlu0 %724
        %727 = vset.pattern.permute.xlu0 1
        %728 = vperm.xlu0 %727, %v308
        %v729 = vpop.permute.xlu0 %728
        %731 = vset.pattern.permute.xlu0 1
        %732 = vperm.xlu0 %731, %v309
        %v733 = vpop.permute.xlu0 %732
        %735 = vset.pattern.permute.xlu0 1
        %736 = vperm.xlu0 %735, %v310
        %v737 = vpop.permute.xlu0 %736
        %739 = vset.pattern.permute.xlu0 1
        %740 = vperm.xlu0 %739, %v311
        %v741 = vpop.permute.xlu0 %740
        %743 = vset.pattern.permute.xlu0 1
        %744 = vperm.xlu0 %743, %v312
        %v745 = vpop.permute.xlu0 %744
        %747 = vset.pattern.permute.xlu0 1
        %748 = vperm.xlu0 %747, %v313
        %v749 = vpop.permute.xlu0 %748
        %751 = vset.pattern.permute.xlu0 1
        %752 = vperm.xlu0 %751, %v314
        %v753 = vpop.permute.xlu0 %752
        %755 = vset.pattern.permute.xlu0 1
        %756 = vperm.xlu0 %755, %v315
        %v757 = vpop.permute.xlu0 %756
        %759 = vset.pattern.permute.xlu0 1
        %760 = vperm.xlu0 %759, %v316
        %v761 = vpop.permute.xlu0 %760
        %763 = vset.pattern.permute.xlu0 1
        %764 = vperm.xlu0 %763, %v317
        %v765 = vpop.permute.xlu0 %764
        %767 = vset.pattern.permute.xlu0 1
        %768 = vperm.xlu0 %767, %v318
        %v769 = vpop.permute.xlu0 %768
        %v771 = vmul.f32 %v641, %v645
        %v772 = vmul.f32 %v640, %v649
        %v773 = vmul.f32 %v639, %v653
        %v774 = vmul.f32 %v638, %v657
        %v775 = vmul.f32 %v637, %v661
        %v776 = vmul.f32 %v636, %v665
        %v777 = vmul.f32 %v635, %v669
        %v778 = vmul.f32 %v634, %v673
        %v779 = vmul.f32 %v633, %v677
        %v780 = vmul.f32 %v632, %v681
        %v781 = vmul.f32 %v631, %v685
        %v782 = vmul.f32 %v630, %v689
        %v783 = vmul.f32 %v629, %v693
        %v784 = vmul.f32 %v628, %v697
        %v785 = vmul.f32 %v627, %v701
        %v786 = vmul.f32 %v626, %v705
        %v787 = vmul.f32 %v625, %v709
        %v788 = vmul.f32 %v624, %v713
        %v789 = vmul.f32 %v623, %v717
        %v790 = vmul.f32 %v622, %v721
        %v791 = vmul.f32 %v621, %v725
        %v792 = vmul.f32 %v620, %v729
        %v793 = vmul.f32 %v619, %v733
        %v794 = vmul.f32 %v618, %v737
        %v795 = vmul.f32 %v617, %v741
        %v796 = vmul.f32 %v616, %v745
        %v797 = vmul.f32 %v615, %v749
        %v798 = vmul.f32 %v614, %v753
        %v799 = vmul.f32 %v613, %v757
        %v800 = vmul.f32 %v612, %v761
        %v801 = vmul.f32 %v611, %v765
        %v802 = vmul.f32 %v642, %v769
        %v803 = vperm.slane %v252, 0
        %v804 = vmul.f32 %v803, %v546
        %v805 = vmul.f32 %v803, %v547
        %v806 = vmul.f32 %v803, %v548
        %v807 = vmul.f32 %v803, %v549
        %v808 = vmul.f32 %v803, %v550
        %v809 = vmul.f32 %v803, %v551
        %v810 = vmul.f32 %v803, %v552
        %v811 = vmul.f32 %v803, %v553
        %v812 = vmul.f32 %v803, %v554
        %v813 = vmul.f32 %v803, %v555
        %v814 = vmul.f32 %v803, %v556
        %v815 = vmul.f32 %v803, %v557
        %v816 = vmul.f32 %v803, %v558
        %v817 = vmul.f32 %v803, %v559
        %v818 = vmul.f32 %v803, %v560
        %v819 = vmul.f32 %v803, %v561
        %v820 = vmul.f32 %v803, %v562
        %v821 = vmul.f32 %v803, %v563
        %v822 = vmul.f32 %v803, %v564
        %v823 = vmul.f32 %v803, %v565
        %v824 = vmul.f32 %v803, %v566
        %v825 = vmul.f32 %v803, %v567
        %v826 = vmul.f32 %v803, %v568
        %v827 = vmul.f32 %v803, %v569
        %v828 = vmul.f32 %v803, %v570
        %v829 = vmul.f32 %v803, %v571
        %v830 = vmul.f32 %v803, %v572
        %v831 = vmul.f32 %v803, %v573
        %v832 = vmul.f32 %v803, %v574
        %v833 = vmul.f32 %v803, %v575
        %v834 = vmul.f32 %v803, %v576
        %v835 = vmul.f32 %v803, %v577
        %v836 = vperm.slane %v252, 1
        %v837 = vmul.f32 %v836, %v255
        %v838 = vmul.f32 %v836, %v256
        %v839 = vmul.f32 %v836, %v257
        %v840 = vmul.f32 %v836, %v258
        %v841 = vmul.f32 %v836, %v259
        %v842 = vmul.f32 %v836, %v260
        %v843 = vmul.f32 %v836, %v261
        %v844 = vmul.f32 %v836, %v262
        %v845 = vmul.f32 %v836, %v263
        %v846 = vmul.f32 %v836, %v264
        %v847 = vmul.f32 %v836, %v265
        %v848 = vmul.f32 %v836, %v266
        %v849 = vmul.f32 %v836, %v267
        %v850 = vmul.f32 %v836, %v268
        %v851 = vmul.f32 %v836, %v269
        %v852 = vmul.f32 %v836, %v270
        %v853 = vmul.f32 %v836, %v271
        %v854 = vmul.f32 %v836, %v272
        %v855 = vmul.f32 %v836, %v273
        %v856 = vmul.f32 %v836, %v274
        %v857 = vmul.f32 %v836, %v275
        %v858 = vmul.f32 %v836, %v276
        %v859 = vmul.f32 %v836, %v277
        %v860 = vmul.f32 %v836, %v278
        %v861 = vmul.f32 %v836, %v279
        %v862 = vmul.f32 %v836, %v280
        %v863 = vmul.f32 %v836, %v281
        %v864 = vmul.f32 %v836, %v282
        %v865 = vmul.f32 %v836, %v283
        %v866 = vmul.f32 %v836, %v284
        %v867 = vmul.f32 %v836, %v285
        %v868 = vmul.f32 %v836, %v286
        %v869 = vadd.f32 %v804, %v837
        %v870 = vadd.f32 %v805, %v838
        %v871 = vadd.f32 %v806, %v839
        %v872 = vadd.f32 %v807, %v840
        %v873 = vadd.f32 %v808, %v841
        %v874 = vadd.f32 %v809, %v842
        %v875 = vadd.f32 %v810, %v843
        %v876 = vadd.f32 %v811, %v844
        %v877 = vadd.f32 %v812, %v845
        %v878 = vadd.f32 %v813, %v846
        %v879 = vadd.f32 %v814, %v847
        %v880 = vadd.f32 %v815, %v848
        %v881 = vadd.f32 %v816, %v849
        %v882 = vadd.f32 %v817, %v850
        %v883 = vadd.f32 %v818, %v851
        %v884 = vadd.f32 %v819, %v852
        %v885 = vadd.f32 %v820, %v853
        %v886 = vadd.f32 %v821, %v854
        %v887 = vadd.f32 %v822, %v855
        %v888 = vadd.f32 %v823, %v856
        %v889 = vadd.f32 %v824, %v857
        %v890 = vadd.f32 %v825, %v858
        %v891 = vadd.f32 %v826, %v859
        %v892 = vadd.f32 %v827, %v860
        %v893 = vadd.f32 %v828, %v861
        %v894 = vadd.f32 %v829, %v862
        %v895 = vadd.f32 %v830, %v863
        %v896 = vadd.f32 %v831, %v864
        %v897 = vadd.f32 %v832, %v865
        %v898 = vadd.f32 %v833, %v866
        %v899 = vadd.f32 %v834, %v867
        %v900 = vadd.f32 %v835, %v868
        %v901 = vperm.slane %v252, 2
        %v902 = vmul.f32 %v901, %v771
        %v903 = vmul.f32 %v901, %v772
        %v904 = vmul.f32 %v901, %v773
        %v905 = vmul.f32 %v901, %v774
        %v906 = vmul.f32 %v901, %v775
        %v907 = vmul.f32 %v901, %v776
        %v908 = vmul.f32 %v901, %v777
        %v909 = vmul.f32 %v901, %v778
        %v910 = vmul.f32 %v901, %v779
        %v911 = vmul.f32 %v901, %v780
        %v912 = vmul.f32 %v901, %v781
        %v913 = vmul.f32 %v901, %v782
        %v914 = vmul.f32 %v901, %v783
        %v915 = vmul.f32 %v901, %v784
        %v916 = vmul.f32 %v901, %v785
        %v917 = vmul.f32 %v901, %v786
        %v918 = vmul.f32 %v901, %v787
        %v919 = vmul.f32 %v901, %v788
        %v920 = vmul.f32 %v901, %v789
        %v921 = vmul.f32 %v901, %v790
        %v922 = vmul.f32 %v901, %v791
        %v923 = vmul.f32 %v901, %v792
        %v924 = vmul.f32 %v901, %v793
        %v925 = vmul.f32 %v901, %v794
        %v926 = vmul.f32 %v901, %v795
        %v927 = vmul.f32 %v901, %v796
        %v928 = vmul.f32 %v901, %v797
        %v929 = vmul.f32 %v901, %v798
        %v930 = vmul.f32 %v901, %v799
        %v931 = vmul.f32 %v901, %v800
        %v932 = vmul.f32 %v901, %v801
        %v933 = vmul.f32 %v901, %v802
        %v934 = vadd.f32 %v869, %v902
        %v935 = vadd.f32 %v870, %v903
        %v936 = vadd.f32 %v871, %v904
        %v937 = vadd.f32 %v872, %v905
        %v938 = vadd.f32 %v873, %v906
        %v939 = vadd.f32 %v874, %v907
        %v940 = vadd.f32 %v875, %v908
        %v941 = vadd.f32 %v876, %v909
        %v942 = vadd.f32 %v877, %v910
        %v943 = vadd.f32 %v878, %v911
        %v944 = vadd.f32 %v879, %v912
        %v945 = vadd.f32 %v880, %v913
        %v946 = vadd.f32 %v881, %v914
        %v947 = vadd.f32 %v882, %v915
        %v948 = vadd.f32 %v883, %v916
        %v949 = vadd.f32 %v884, %v917
        %v950 = vadd.f32 %v885, %v918
        %v951 = vadd.f32 %v886, %v919
        %v952 = vadd.f32 %v887, %v920
        %v953 = vadd.f32 %v888, %v921
        %v954 = vadd.f32 %v889, %v922
        %v955 = vadd.f32 %v890, %v923
        %v956 = vadd.f32 %v891, %v924
        %v957 = vadd.f32 %v892, %v925
        %v958 = vadd.f32 %v893, %v926
        %v959 = vadd.f32 %v894, %v927
        %v960 = vadd.f32 %v895, %v928
        %v961 = vadd.f32 %v896, %v929
        %v962 = vadd.f32 %v897, %v930
        %v963 = vadd.f32 %v898, %v931
        %v964 = vadd.f32 %v899, %v932
        %v965 = vadd.f32 %v900, %v933
        %v967 = vperm.slane %v254, 0
        %v969 = vadd.f32 %v967, %v934
        %v970 = vadd.f32 %v967, %v935
        %v971 = vadd.f32 %v967, %v936
        %v972 = vadd.f32 %v967, %v937
        %v973 = vadd.f32 %v967, %v938
        %v974 = vadd.f32 %v967, %v939
        %v975 = vadd.f32 %v967, %v940
        %v976 = vadd.f32 %v967, %v941
        %v977 = vadd.f32 %v967, %v942
        %v978 = vadd.f32 %v967, %v943
        %v979 = vadd.f32 %v967, %v944
        %v980 = vadd.f32 %v967, %v945
        %v981 = vadd.f32 %v967, %v946
        %v982 = vadd.f32 %v967, %v947
        %v983 = vadd.f32 %v967, %v948
        %v984 = vadd.f32 %v967, %v949
        %v985 = vadd.f32 %v967, %v950
        %v986 = vadd.f32 %v967, %v951
        %v987 = vadd.f32 %v967, %v952
        %v988 = vadd.f32 %v967, %v953
        %v989 = vadd.f32 %v967, %v954
        %v990 = vadd.f32 %v967, %v955
        %v991 = vadd.f32 %v967, %v956
        %v992 = vadd.f32 %v967, %v957
        %v993 = vadd.f32 %v967, %v958
        %v994 = vadd.f32 %v967, %v959
        %v995 = vadd.f32 %v967, %v960
        %v996 = vadd.f32 %v967, %v961
        %v997 = vadd.f32 %v967, %v962
        %v998 = vadd.f32 %v967, %v963
        %v999 = vadd.f32 %v967, %v964
        %v1000 = vadd.f32 %v967, %v965
        %v1001 = vperm.slane %v251, 0
        %v1002 = vmul.f32 %v1001, %v546
        %v1003 = vmul.f32 %v1001, %v547
        %v1004 = vmul.f32 %v1001, %v548
        %v1005 = vmul.f32 %v1001, %v549
        %v1006 = vmul.f32 %v1001, %v550
        %v1007 = vmul.f32 %v1001, %v551
        %v1008 = vmul.f32 %v1001, %v552
        %v1009 = vmul.f32 %v1001, %v553
        %v1010 = vmul.f32 %v1001, %v554
        %v1011 = vmul.f32 %v1001, %v555
        %v1012 = vmul.f32 %v1001, %v556
        %v1013 = vmul.f32 %v1001, %v557
        %v1014 = vmul.f32 %v1001, %v558
        %v1015 = vmul.f32 %v1001, %v559
        %v1016 = vmul.f32 %v1001, %v560
        %v1017 = vmul.f32 %v1001, %v561
        %v1018 = vmul.f32 %v1001, %v562
        %v1019 = vmul.f32 %v1001, %v563
        %v1020 = vmul.f32 %v1001, %v564
        %v1021 = vmul.f32 %v1001, %v565
        %v1022 = vmul.f32 %v1001, %v566
        %v1023 = vmul.f32 %v1001, %v567
        %v1024 = vmul.f32 %v1001, %v568
        %v1025 = vmul.f32 %v1001, %v569
        %v1026 = vmul.f32 %v1001, %v570
        %v1027 = vmul.f32 %v1001, %v571
        %v1028 = vmul.f32 %v1001, %v572
        %v1029 = vmul.f32 %v1001, %v573
        %v1030 = vmul.f32 %v1001, %v574
        %v1031 = vmul.f32 %v1001, %v575
        %v1032 = vmul.f32 %v1001, %v576
        %v1033 = vmul.f32 %v1001, %v577
        %v1034 = vperm.slane %v251, 1
        %v1035 = vmul.f32 %v1034, %v255
        %v1036 = vmul.f32 %v1034, %v256
        %v1037 = vmul.f32 %v1034, %v257
        %v1038 = vmul.f32 %v1034, %v258
        %v1039 = vmul.f32 %v1034, %v259
        %v1040 = vmul.f32 %v1034, %v260
        %v1041 = vmul.f32 %v1034, %v261
        %v1042 = vmul.f32 %v1034, %v262
        %v1043 = vmul.f32 %v1034, %v263
        %v1044 = vmul.f32 %v1034, %v264
        %v1045 = vmul.f32 %v1034, %v265
        %v1046 = vmul.f32 %v1034, %v266
        %v1047 = vmul.f32 %v1034, %v267
        %v1048 = vmul.f32 %v1034, %v268
        %v1049 = vmul.f32 %v1034, %v269
        %v1050 = vmul.f32 %v1034, %v270
        %v1051 = vmul.f32 %v1034, %v271
        %v1052 = vmul.f32 %v1034, %v272
        %v1053 = vmul.f32 %v1034, %v273
        %v1054 = vmul.f32 %v1034, %v274
        %v1055 = vmul.f32 %v1034, %v275
        %v1056 = vmul.f32 %v1034, %v276
        %v1057 = vmul.f32 %v1034, %v277
        %v1058 = vmul.f32 %v1034, %v278
        %v1059 = vmul.f32 %v1034, %v279
        %v1060 = vmul.f32 %v1034, %v280
        %v1061 = vmul.f32 %v1034, %v281
        %v1062 = vmul.f32 %v1034, %v282
        %v1063 = vmul.f32 %v1034, %v283
        %v1064 = vmul.f32 %v1034, %v284
        %v1065 = vmul.f32 %v1034, %v285
        %v1066 = vmul.f32 %v1034, %v286
        %v1067 = vadd.f32 %v1002, %v1035
        %v1068 = vadd.f32 %v1003, %v1036
        %v1069 = vadd.f32 %v1004, %v1037
        %v1070 = vadd.f32 %v1005, %v1038
        %v1071 = vadd.f32 %v1006, %v1039
        %v1072 = vadd.f32 %v1007, %v1040
        %v1073 = vadd.f32 %v1008, %v1041
        %v1074 = vadd.f32 %v1009, %v1042
        %v1075 = vadd.f32 %v1010, %v1043
        %v1076 = vadd.f32 %v1011, %v1044
        %v1077 = vadd.f32 %v1012, %v1045
        %v1078 = vadd.f32 %v1013, %v1046
        %v1079 = vadd.f32 %v1014, %v1047
        %v1080 = vadd.f32 %v1015, %v1048
        %v1081 = vadd.f32 %v1016, %v1049
        %v1082 = vadd.f32 %v1017, %v1050
        %v1083 = vadd.f32 %v1018, %v1051
        %v1084 = vadd.f32 %v1019, %v1052
        %v1085 = vadd.f32 %v1020, %v1053
        %v1086 = vadd.f32 %v1021, %v1054
        %v1087 = vadd.f32 %v1022, %v1055
        %v1088 = vadd.f32 %v1023, %v1056
        %v1089 = vadd.f32 %v1024, %v1057
        %v1090 = vadd.f32 %v1025, %v1058
        %v1091 = vadd.f32 %v1026, %v1059
        %v1092 = vadd.f32 %v1027, %v1060
        %v1093 = vadd.f32 %v1028, %v1061
        %v1094 = vadd.f32 %v1029, %v1062
        %v1095 = vadd.f32 %v1030, %v1063
        %v1096 = vadd.f32 %v1031, %v1064
        %v1097 = vadd.f32 %v1032, %v1065
        %v1098 = vadd.f32 %v1033, %v1066
        %v1099 = vperm.slane %v251, 2
        %v1100 = vmul.f32 %v1099, %v771
        %v1101 = vmul.f32 %v1099, %v772
        %v1102 = vmul.f32 %v1099, %v773
        %v1103 = vmul.f32 %v1099, %v774
        %v1104 = vmul.f32 %v1099, %v775
        %v1105 = vmul.f32 %v1099, %v776
        %v1106 = vmul.f32 %v1099, %v777
        %v1107 = vmul.f32 %v1099, %v778
        %v1108 = vmul.f32 %v1099, %v779
        %v1109 = vmul.f32 %v1099, %v780
        %v1110 = vmul.f32 %v1099, %v781
        %v1111 = vmul.f32 %v1099, %v782
        %v1112 = vmul.f32 %v1099, %v783
        %v1113 = vmul.f32 %v1099, %v784
        %v1114 = vmul.f32 %v1099, %v785
        %v1115 = vmul.f32 %v1099, %v786
        %v1116 = vmul.f32 %v1099, %v787
        %v1117 = vmul.f32 %v1099, %v788
        %v1118 = vmul.f32 %v1099, %v789
        %v1119 = vmul.f32 %v1099, %v790
        %v1120 = vmul.f32 %v1099, %v791
        %v1121 = vmul.f32 %v1099, %v792
        %v1122 = vmul.f32 %v1099, %v793
        %v1123 = vmul.f32 %v1099, %v794
        %v1124 = vmul.f32 %v1099, %v795
        %v1125 = vmul.f32 %v1099, %v796
        %v1126 = vmul.f32 %v1099, %v797
        %v1127 = vmul.f32 %v1099, %v798
        %v1128 = vmul.f32 %v1099, %v799
        %v1129 = vmul.f32 %v1099, %v800
        %v1130 = vmul.f32 %v1099, %v801
        %v1131 = vmul.f32 %v1099, %v802
        %v1132 = vadd.f32 %v1067, %v1100
        %v1133 = vadd.f32 %v1068, %v1101
        %v1134 = vadd.f32 %v1069, %v1102
        %v1135 = vadd.f32 %v1070, %v1103
        %v1136 = vadd.f32 %v1071, %v1104
        %v1137 = vadd.f32 %v1072, %v1105
        %v1138 = vadd.f32 %v1073, %v1106
        %v1139 = vadd.f32 %v1074, %v1107
        %v1140 = vadd.f32 %v1075, %v1108
        %v1141 = vadd.f32 %v1076, %v1109
        %v1142 = vadd.f32 %v1077, %v1110
        %v1143 = vadd.f32 %v1078, %v1111
        %v1144 = vadd.f32 %v1079, %v1112
        %v1145 = vadd.f32 %v1080, %v1113
        %v1146 = vadd.f32 %v1081, %v1114
        %v1147 = vadd.f32 %v1082, %v1115
        %v1148 = vadd.f32 %v1083, %v1116
        %v1149 = vadd.f32 %v1084, %v1117
        %v1150 = vadd.f32 %v1085, %v1118
        %v1151 = vadd.f32 %v1086, %v1119
        %v1152 = vadd.f32 %v1087, %v1120
        %v1153 = vadd.f32 %v1088, %v1121
        %v1154 = vadd.f32 %v1089, %v1122
        %v1155 = vadd.f32 %v1090, %v1123
        %v1156 = vadd.f32 %v1091, %v1124
        %v1157 = vadd.f32 %v1092, %v1125
        %v1158 = vadd.f32 %v1093, %v1126
        %v1159 = vadd.f32 %v1094, %v1127
        %v1160 = vadd.f32 %v1095, %v1128
        %v1161 = vadd.f32 %v1096, %v1129
        %v1162 = vadd.f32 %v1097, %v1130
        %v1163 = vadd.f32 %v1098, %v1131
        %1164 = vset.pattern.permute.xlu0 2
        %1165 = vperm.xlu0 %1164, %v287
        %v1166 = vpop.permute.xlu0 %1165
        %1168 = vset.pattern.permute.xlu0 2
        %1169 = vperm.xlu0 %1168, %v288
        %v1170 = vpop.permute.xlu0 %1169
        %1172 = vset.pattern.permute.xlu0 2
        %1173 = vperm.xlu0 %1172, %v289
        %v1174 = vpop.permute.xlu0 %1173
        %1176 = vset.pattern.permute.xlu0 2
        %1177 = vperm.xlu0 %1176, %v290
        %v1178 = vpop.permute.xlu0 %1177
        %1180 = vset.pattern.permute.xlu0 2
        %1181 = vperm.xlu0 %1180, %v291
        %v1182 = vpop.permute.xlu0 %1181
        %1184 = vset.pattern.permute.xlu0 2
        %1185 = vperm.xlu0 %1184, %v292
        %v1186 = vpop.permute.xlu0 %1185
        %1188 = vset.pattern.permute.xlu0 2
        %1189 = vperm.xlu0 %1188, %v293
        %v1190 = vpop.permute.xlu0 %1189
        %1192 = vset.pattern.permute.xlu0 2
        %1193 = vperm.xlu0 %1192, %v294
        %v1194 = vpop.permute.xlu0 %1193
        %1196 = vset.pattern.permute.xlu0 2
        %1197 = vperm.xlu0 %1196, %v295
        %v1198 = vpop.permute.xlu0 %1197
        %1200 = vset.pattern.permute.xlu0 2
        %1201 = vperm.xlu0 %1200, %v296
        %v1202 = vpop.permute.xlu0 %1201
        %1204 = vset.pattern.permute.xlu0 2
        %1205 = vperm.xlu0 %1204, %v297
        %v1206 = vpop.permute.xlu0 %1205
        %1208 = vset.pattern.permute.xlu0 2
        %1209 = vperm.xlu0 %1208, %v298
        %v1210 = vpop.permute.xlu0 %1209
        %1212 = vset.pattern.permute.xlu0 2
        %1213 = vperm.xlu0 %1212, %v299
        %v1214 = vpop.permute.xlu0 %1213
        %1216 = vset.pattern.permute.xlu0 2
        %1217 = vperm.xlu0 %1216, %v300
        %v1218 = vpop.permute.xlu0 %1217
        %1220 = vset.pattern.permute.xlu0 2
        %1221 = vperm.xlu0 %1220, %v301
        %v1222 = vpop.permute.xlu0 %1221
        %1224 = vset.pattern.permute.xlu0 2
        %1225 = vperm.xlu0 %1224, %v302
        %v1226 = vpop.permute.xlu0 %1225
        %1228 = vset.pattern.permute.xlu0 2
        %1229 = vperm.xlu0 %1228, %v303
        %v1230 = vpop.permute.xlu0 %1229
        %1232 = vset.pattern.permute.xlu0 2
        %1233 = vperm.xlu0 %1232, %v304
        %v1234 = vpop.permute.xlu0 %1233
        %1236 = vset.pattern.permute.xlu0 2
        %1237 = vperm.xlu0 %1236, %v305
        %v1238 = vpop.permute.xlu0 %1237
        %1240 = vset.pattern.permute.xlu0 2
        %1241 = vperm.xlu0 %1240, %v306
        %v1242 = vpop.permute.xlu0 %1241
        %1244 = vset.pattern.permute.xlu0 2
        %1245 = vperm.xlu0 %1244, %v307
        %v1246 = vpop.permute.xlu0 %1245
        %1248 = vset.pattern.permute.xlu0 2
        %1249 = vperm.xlu0 %1248, %v308
        %v1250 = vpop.permute.xlu0 %1249
        %1252 = vset.pattern.permute.xlu0 2
        %1253 = vperm.xlu0 %1252, %v309
        %v1254 = vpop.permute.xlu0 %1253
        %1256 = vset.pattern.permute.xlu0 2
        %1257 = vperm.xlu0 %1256, %v310
        %v1258 = vpop.permute.xlu0 %1257
        %1260 = vset.pattern.permute.xlu0 2
        %1261 = vperm.xlu0 %1260, %v311
        %v1262 = vpop.permute.xlu0 %1261
        %1264 = vset.pattern.permute.xlu0 2
        %1265 = vperm.xlu0 %1264, %v312
        %v1266 = vpop.permute.xlu0 %1265
        %1268 = vset.pattern.permute.xlu0 2
        %1269 = vperm.xlu0 %1268, %v313
        %v1270 = vpop.permute.xlu0 %1269
        %1272 = vset.pattern.permute.xlu0 2
        %1273 = vperm.xlu0 %1272, %v314
        %v1274 = vpop.permute.xlu0 %1273
        %1276 = vset.pattern.permute.xlu0 2
        %1277 = vperm.xlu0 %1276, %v315
        %v1278 = vpop.permute.xlu0 %1277
        %1280 = vset.pattern.permute.xlu0 2
        %1281 = vperm.xlu0 %1280, %v316
        %v1282 = vpop.permute.xlu0 %1281
        %1284 = vset.pattern.permute.xlu0 2
        %1285 = vperm.xlu0 %1284, %v317
        %v1286 = vpop.permute.xlu0 %1285
        %1288 = vset.pattern.permute.xlu0 2
        %1289 = vperm.xlu0 %1288, %v318
        %v1290 = vpop.permute.xlu0 %1289
        %v1292 = vmul.f32 %v1162, %v1166
        %v1293 = vmul.f32 %v1163, %v1170
        %v1294 = vmul.f32 %v1132, %v1174
        %v1295 = vmul.f32 %v1133, %v1178
        %v1296 = vmul.f32 %v1134, %v1182
        %v1297 = vmul.f32 %v1135, %v1186
        %v1298 = vmul.f32 %v1136, %v1190
        %v1299 = vmul.f32 %v1137, %v1194
        %v1300 = vmul.f32 %v1138, %v1198
        %v1301 = vmul.f32 %v1139, %v1202
        %v1302 = vmul.f32 %v1140, %v1206
        %v1303 = vmul.f32 %v1141, %v1210
        %v1304 = vmul.f32 %v1142, %v1214
        %v1305 = vmul.f32 %v1143, %v1218
        %v1306 = vmul.f32 %v1144, %v1222
        %v1307 = vmul.f32 %v1145, %v1226
        %v1308 = vmul.f32 %v1146, %v1230
        %v1309 = vmul.f32 %v1147, %v1234
        %v1310 = vmul.f32 %v1148, %v1238
        %v1311 = vmul.f32 %v1149, %v1242
        %v1312 = vmul.f32 %v1150, %v1246
        %v1313 = vmul.f32 %v1151, %v1250
        %v1314 = vmul.f32 %v1152, %v1254
        %v1315 = vmul.f32 %v1153, %v1258
        %v1316 = vmul.f32 %v1154, %v1262
        %v1317 = vmul.f32 %v1155, %v1266
        %v1318 = vmul.f32 %v1156, %v1270
        %v1319 = vmul.f32 %v1157, %v1274
        %v1320 = vmul.f32 %v1158, %v1278
        %v1321 = vmul.f32 %v1159, %v1282
        %v1322 = vmul.f32 %v1160, %v1286
        %v1323 = vmul.f32 %v1161, %v1290
        %v1324 = vadd.f32 %v969, %v1292
        %v1325 = vadd.f32 %v970, %v1293
        %v1326 = vadd.f32 %v971, %v1294
        %v1327 = vadd.f32 %v972, %v1295
        %v1328 = vadd.f32 %v973, %v1296
        %v1329 = vadd.f32 %v974, %v1297
        %v1330 = vadd.f32 %v975, %v1298
        %v1331 = vadd.f32 %v976, %v1299
        %v1332 = vadd.f32 %v977, %v1300
        %v1333 = vadd.f32 %v978, %v1301
        %v1334 = vadd.f32 %v979, %v1302
        %v1335 = vadd.f32 %v980, %v1303
        %v1336 = vadd.f32 %v981, %v1304
        %v1337 = vadd.f32 %v982, %v1305
        %v1338 = vadd.f32 %v983, %v1306
        %v1339 = vadd.f32 %v984, %v1307
        %v1340 = vadd.f32 %v985, %v1308
        %v1341 = vadd.f32 %v986, %v1309
        %v1342 = vadd.f32 %v987, %v1310
        %v1343 = vadd.f32 %v988, %v1311
        %v1344 = vadd.f32 %v989, %v1312
        %v1345 = vadd.f32 %v990, %v1313
        %v1346 = vadd.f32 %v991, %v1314
        %v1347 = vadd.f32 %v992, %v1315
        %v1348 = vadd.f32 %v993, %v1316
        %v1349 = vadd.f32 %v994, %v1317
        %v1350 = vadd.f32 %v995, %v1318
        %v1351 = vadd.f32 %v996, %v1319
        %v1352 = vadd.f32 %v997, %v1320
        %v1353 = vadd.f32 %v998, %v1321
        %v1354 = vadd.f32 %v999, %v1322
        %v1355 = vadd.f32 %v1000, %v1323
        %v1356 = vperm.slane %v253, 0
        %v1357 = vmul.f32 %v1356, %v546
        %v1358 = vmul.f32 %v1356, %v547
        %v1359 = vmul.f32 %v1356, %v548
        %v1360 = vmul.f32 %v1356, %v549
        %v1361 = vmul.f32 %v1356, %v550
        %v1362 = vmul.f32 %v1356, %v551
        %v1363 = vmul.f32 %v1356, %v552
        %v1364 = vmul.f32 %v1356, %v553
        %v1365 = vmul.f32 %v1356, %v554
        %v1366 = vmul.f32 %v1356, %v555
        %v1367 = vmul.f32 %v1356, %v556
        %v1368 = vmul.f32 %v1356, %v557
        %v1369 = vmul.f32 %v1356, %v558
        %v1370 = vmul.f32 %v1356, %v559
        %v1371 = vmul.f32 %v1356, %v560
        %v1372 = vmul.f32 %v1356, %v561
        %v1373 = vmul.f32 %v1356, %v562
        %v1374 = vmul.f32 %v1356, %v563
        %v1375 = vmul.f32 %v1356, %v564
        %v1376 = vmul.f32 %v1356, %v565
        %v1377 = vmul.f32 %v1356, %v566
        %v1378 = vmul.f32 %v1356, %v567
        %v1379 = vmul.f32 %v1356, %v568
        %v1380 = vmul.f32 %v1356, %v569
        %v1381 = vmul.f32 %v1356, %v570
        %v1382 = vmul.f32 %v1356, %v571
        %v1383 = vmul.f32 %v1356, %v572
        %v1384 = vmul.f32 %v1356, %v573
        %v1385 = vmul.f32 %v1356, %v574
        %v1386 = vmul.f32 %v1356, %v575
        %v1387 = vmul.f32 %v1356, %v576
        %v1388 = vmul.f32 %v1356, %v577
        %v1389 = vperm.slane %v253, 1
        %v1390 = vmul.f32 %v1389, %v255
        %v1391 = vmul.f32 %v1389, %v256
        %v1392 = vmul.f32 %v1389, %v257
        %v1393 = vmul.f32 %v1389, %v258
        %v1394 = vmul.f32 %v1389, %v259
        %v1395 = vmul.f32 %v1389, %v260
        %v1396 = vmul.f32 %v1389, %v261
        %v1397 = vmul.f32 %v1389, %v262
        %v1398 = vmul.f32 %v1389, %v263
        %v1399 = vmul.f32 %v1389, %v264
        %v1400 = vmul.f32 %v1389, %v265
        %v1401 = vmul.f32 %v1389, %v266
        %v1402 = vmul.f32 %v1389, %v267
        %v1403 = vmul.f32 %v1389, %v268
        %v1404 = vmul.f32 %v1389, %v269
        %v1405 = vmul.f32 %v1389, %v270
        %v1406 = vmul.f32 %v1389, %v271
        %v1407 = vmul.f32 %v1389, %v272
        %v1408 = vmul.f32 %v1389, %v273
        %v1409 = vmul.f32 %v1389, %v274
        %v1410 = vmul.f32 %v1389, %v275
        %v1411 = vmul.f32 %v1389, %v276
        %v1412 = vmul.f32 %v1389, %v277
        %v1413 = vmul.f32 %v1389, %v278
        %v1414 = vmul.f32 %v1389, %v279
        %v1415 = vmul.f32 %v1389, %v280
        %v1416 = vmul.f32 %v1389, %v281
        %v1417 = vmul.f32 %v1389, %v282
        %v1418 = vmul.f32 %v1389, %v283
        %v1419 = vmul.f32 %v1389, %v284
        %v1420 = vmul.f32 %v1389, %v285
        %v1421 = vmul.f32 %v1389, %v286
        %v1422 = vadd.f32 %v1357, %v1390
        %v1423 = vadd.f32 %v1358, %v1391
        %v1424 = vadd.f32 %v1359, %v1392
        %v1425 = vadd.f32 %v1360, %v1393
        %v1426 = vadd.f32 %v1361, %v1394
        %v1427 = vadd.f32 %v1362, %v1395
        %v1428 = vadd.f32 %v1363, %v1396
        %v1429 = vadd.f32 %v1364, %v1397
        %v1430 = vadd.f32 %v1365, %v1398
        %v1431 = vadd.f32 %v1366, %v1399
        %v1432 = vadd.f32 %v1367, %v1400
        %v1433 = vadd.f32 %v1368, %v1401
        %v1434 = vadd.f32 %v1369, %v1402
        %v1435 = vadd.f32 %v1370, %v1403
        %v1436 = vadd.f32 %v1371, %v1404
        %v1437 = vadd.f32 %v1372, %v1405
        %v1438 = vadd.f32 %v1373, %v1406
        %v1439 = vadd.f32 %v1374, %v1407
        %v1440 = vadd.f32 %v1375, %v1408
        %v1441 = vadd.f32 %v1376, %v1409
        %v1442 = vadd.f32 %v1377, %v1410
        %v1443 = vadd.f32 %v1378, %v1411
        %v1444 = vadd.f32 %v1379, %v1412
        %v1445 = vadd.f32 %v1380, %v1413
        %v1446 = vadd.f32 %v1381, %v1414
        %v1447 = vadd.f32 %v1382, %v1415
        %v1448 = vadd.f32 %v1383, %v1416
        %v1449 = vadd.f32 %v1384, %v1417
        %v1450 = vadd.f32 %v1385, %v1418
        %v1451 = vadd.f32 %v1386, %v1419
        %v1452 = vadd.f32 %v1387, %v1420
        %v1453 = vadd.f32 %v1388, %v1421
        %v1454 = vperm.slane %v253, 2
        %v1455 = vmul.f32 %v1454, %v771
        %v1456 = vmul.f32 %v1454, %v772
        %v1457 = vmul.f32 %v1454, %v773
        %v1458 = vmul.f32 %v1454, %v774
        %v1459 = vmul.f32 %v1454, %v775
        %v1460 = vmul.f32 %v1454, %v776
        %v1461 = vmul.f32 %v1454, %v777
        %v1462 = vmul.f32 %v1454, %v778
        %v1463 = vmul.f32 %v1454, %v779
        %v1464 = vmul.f32 %v1454, %v780
        %v1465 = vmul.f32 %v1454, %v781
        %v1466 = vmul.f32 %v1454, %v782
        %v1467 = vmul.f32 %v1454, %v783
        %v1468 = vmul.f32 %v1454, %v784
        %v1469 = vmul.f32 %v1454, %v785
        %v1470 = vmul.f32 %v1454, %v786
        %v1471 = vmul.f32 %v1454, %v787
        %v1472 = vmul.f32 %v1454, %v788
        %v1473 = vmul.f32 %v1454, %v789
        %v1474 = vmul.f32 %v1454, %v790
        %v1475 = vmul.f32 %v1454, %v791
        %v1476 = vmul.f32 %v1454, %v792
        %v1477 = vmul.f32 %v1454, %v793
        %v1478 = vmul.f32 %v1454, %v794
        %v1479 = vmul.f32 %v1454, %v795
        %v1480 = vmul.f32 %v1454, %v796
        %v1481 = vmul.f32 %v1454, %v797
        %v1482 = vmul.f32 %v1454, %v798
        %v1483 = vmul.f32 %v1454, %v799
        %v1484 = vmul.f32 %v1454, %v800
        %v1485 = vmul.f32 %v1454, %v801
        %v1486 = vmul.f32 %v1454, %v802
        %v1487 = vadd.f32 %v1422, %v1455
        %v1488 = vadd.f32 %v1423, %v1456
        %v1489 = vadd.f32 %v1424, %v1457
        %v1490 = vadd.f32 %v1425, %v1458
        %v1491 = vadd.f32 %v1426, %v1459
        %v1492 = vadd.f32 %v1427, %v1460
        %v1493 = vadd.f32 %v1428, %v1461
        %v1494 = vadd.f32 %v1429, %v1462
        %v1495 = vadd.f32 %v1430, %v1463
        %v1496 = vadd.f32 %v1431, %v1464
        %v1497 = vadd.f32 %v1432, %v1465
        %v1498 = vadd.f32 %v1433, %v1466
        %v1499 = vadd.f32 %v1434, %v1467
        %v1500 = vadd.f32 %v1435, %v1468
        %v1501 = vadd.f32 %v1436, %v1469
        %v1502 = vadd.f32 %v1437, %v1470
        %v1503 = vadd.f32 %v1438, %v1471
        %v1504 = vadd.f32 %v1439, %v1472
        %v1505 = vadd.f32 %v1440, %v1473
        %v1506 = vadd.f32 %v1441, %v1474
        %v1507 = vadd.f32 %v1442, %v1475
        %v1508 = vadd.f32 %v1443, %v1476
        %v1509 = vadd.f32 %v1444, %v1477
        %v1510 = vadd.f32 %v1445, %v1478
        %v1511 = vadd.f32 %v1446, %v1479
        %v1512 = vadd.f32 %v1447, %v1480
        %v1513 = vadd.f32 %v1448, %v1481
        %v1514 = vadd.f32 %v1449, %v1482
        %v1515 = vadd.f32 %v1450, %v1483
        %v1516 = vadd.f32 %v1451, %v1484
        %v1517 = vadd.f32 %v1452, %v1485
        %v1518 = vadd.f32 %v1453, %v1486
        %1519 = vset.pattern.permute.xlu0 3
        %1520 = vperm.xlu0 %1519, %v287
        %v1521 = vpop.permute.xlu0 %1520
        %1523 = vset.pattern.permute.xlu0 3
        %1524 = vperm.xlu0 %1523, %v288
        %v1525 = vpop.permute.xlu0 %1524
        %1527 = vset.pattern.permute.xlu0 3
        %1528 = vperm.xlu0 %1527, %v289
        %v1529 = vpop.permute.xlu0 %1528
        %1531 = vset.pattern.permute.xlu0 3
        %1532 = vperm.xlu0 %1531, %v290
        %v1533 = vpop.permute.xlu0 %1532
        %1535 = vset.pattern.permute.xlu0 3
        %1536 = vperm.xlu0 %1535, %v291
        %v1537 = vpop.permute.xlu0 %1536
        %1539 = vset.pattern.permute.xlu0 3
        %1540 = vperm.xlu0 %1539, %v292
        %v1541 = vpop.permute.xlu0 %1540
        %1543 = vset.pattern.permute.xlu0 3
        %1544 = vperm.xlu0 %1543, %v293
        %v1545 = vpop.permute.xlu0 %1544
        %1547 = vset.pattern.permute.xlu0 3
        %1548 = vperm.xlu0 %1547, %v294
        %v1549 = vpop.permute.xlu0 %1548
        %1551 = vset.pattern.permute.xlu0 3
        %1552 = vperm.xlu0 %1551, %v295
        %v1553 = vpop.permute.xlu0 %1552
        %1555 = vset.pattern.permute.xlu0 3
        %1556 = vperm.xlu0 %1555, %v296
        %v1557 = vpop.permute.xlu0 %1556
        %1559 = vset.pattern.permute.xlu0 3
        %1560 = vperm.xlu0 %1559, %v297
        %v1561 = vpop.permute.xlu0 %1560
        %1563 = vset.pattern.permute.xlu0 3
        %1564 = vperm.xlu0 %1563, %v298
        %v1565 = vpop.permute.xlu0 %1564
        %1567 = vset.pattern.permute.xlu0 3
        %1568 = vperm.xlu0 %1567, %v299
        %v1569 = vpop.permute.xlu0 %1568
        %1571 = vset.pattern.permute.xlu0 3
        %1572 = vperm.xlu0 %1571, %v300
        %v1573 = vpop.permute.xlu0 %1572
        %1575 = vset.pattern.permute.xlu0 3
        %1576 = vperm.xlu0 %1575, %v301
        %v1577 = vpop.permute.xlu0 %1576
        %1579 = vset.pattern.permute.xlu0 3
        %1580 = vperm.xlu0 %1579, %v302
        %v1581 = vpop.permute.xlu0 %1580
        %1583 = vset.pattern.permute.xlu0 3
        %1584 = vperm.xlu0 %1583, %v303
        %v1585 = vpop.permute.xlu0 %1584
        %1587 = vset.pattern.permute.xlu0 3
        %1588 = vperm.xlu0 %1587, %v304
        %v1589 = vpop.permute.xlu0 %1588
        %1591 = vset.pattern.permute.xlu0 3
        %1592 = vperm.xlu0 %1591, %v305
        %v1593 = vpop.permute.xlu0 %1592
        %1595 = vset.pattern.permute.xlu0 3
        %1596 = vperm.xlu0 %1595, %v306
        %v1597 = vpop.permute.xlu0 %1596
        %1599 = vset.pattern.permute.xlu0 3
        %1600 = vperm.xlu0 %1599, %v307
        %v1601 = vpop.permute.xlu0 %1600
        %1603 = vset.pattern.permute.xlu0 3
        %1604 = vperm.xlu0 %1603, %v308
        %v1605 = vpop.permute.xlu0 %1604
        %1607 = vset.pattern.permute.xlu0 3
        %1608 = vperm.xlu0 %1607, %v309
        %v1609 = vpop.permute.xlu0 %1608
        %1611 = vset.pattern.permute.xlu0 3
        %1612 = vperm.xlu0 %1611, %v310
        %v1613 = vpop.permute.xlu0 %1612
        %1615 = vset.pattern.permute.xlu0 3
        %1616 = vperm.xlu0 %1615, %v311
        %v1617 = vpop.permute.xlu0 %1616
        %1619 = vset.pattern.permute.xlu0 3
        %1620 = vperm.xlu0 %1619, %v312
        %v1621 = vpop.permute.xlu0 %1620
        %1623 = vset.pattern.permute.xlu0 3
        %1624 = vperm.xlu0 %1623, %v313
        %v1625 = vpop.permute.xlu0 %1624
        %1627 = vset.pattern.permute.xlu0 3
        %1628 = vperm.xlu0 %1627, %v314
        %v1629 = vpop.permute.xlu0 %1628
        %1631 = vset.pattern.permute.xlu0 3
        %1632 = vperm.xlu0 %1631, %v315
        %v1633 = vpop.permute.xlu0 %1632
        %1635 = vset.pattern.permute.xlu0 3
        %1636 = vperm.xlu0 %1635, %v316
        %v1637 = vpop.permute.xlu0 %1636
        %1639 = vset.pattern.permute.xlu0 3
        %1640 = vperm.xlu0 %1639, %v317
        %v1641 = vpop.permute.xlu0 %1640
        %1643 = vset.pattern.permute.xlu0 3
        %1644 = vperm.xlu0 %1643, %v318
        %v1645 = vpop.permute.xlu0 %1644
        %v1647 = vmul.f32 %v1489, %v1521
        %v1648 = vmul.f32 %v1490, %v1525
        %v1649 = vmul.f32 %v1491, %v1529
        %v1650 = vmul.f32 %v1492, %v1533
        %v1651 = vmul.f32 %v1493, %v1537
        %v1652 = vmul.f32 %v1494, %v1541
        %v1653 = vmul.f32 %v1495, %v1545
        %v1654 = vmul.f32 %v1496, %v1549
        %v1655 = vmul.f32 %v1497, %v1553
        %v1656 = vmul.f32 %v1498, %v1557
        %v1657 = vmul.f32 %v1499, %v1561
        %v1658 = vmul.f32 %v1500, %v1565
        %v1659 = vmul.f32 %v1501, %v1569
        %v1660 = vmul.f32 %v1502, %v1573
        %v1661 = vmul.f32 %v1503, %v1577
        %v1662 = vmul.f32 %v1504, %v1581
        %v1663 = vmul.f32 %v1505, %v1585
        %v1664 = vmul.f32 %v1506, %v1589
        %v1665 = vmul.f32 %v1507, %v1593
        %v1666 = vmul.f32 %v1508, %v1597
        %v1667 = vmul.f32 %v1509, %v1601
        %v1668 = vmul.f32 %v1510, %v1605
        %v1669 = vmul.f32 %v1511, %v1609
        %v1670 = vmul.f32 %v1512, %v1613
        %v1671 = vmul.f32 %v1513, %v1617
        %v1672 = vmul.f32 %v1514, %v1621
        %v1673 = vmul.f32 %v1515, %v1625
        %v1674 = vmul.f32 %v1516, %v1629
        %v1675 = vmul.f32 %v1517, %v1633
        %v1676 = vmul.f32 %v1518, %v1637
        %v1677 = vmul.f32 %v1487, %v1641
        %v1678 = vmul.f32 %v1488, %v1645
        %v1679 = vadd.f32 %v1324, %v1647
        %v1680 = vadd.f32 %v1325, %v1648
        %v1681 = vadd.f32 %v1326, %v1649
        %v1682 = vadd.f32 %v1327, %v1650
        %v1683 = vadd.f32 %v1328, %v1651
        %v1684 = vadd.f32 %v1329, %v1652
        %v1685 = vadd.f32 %v1330, %v1653
        %v1686 = vadd.f32 %v1331, %v1654
        %v1687 = vadd.f32 %v1332, %v1655
        %v1688 = vadd.f32 %v1333, %v1656
        %v1689 = vadd.f32 %v1334, %v1657
        %v1690 = vadd.f32 %v1335, %v1658
        %v1691 = vadd.f32 %v1336, %v1659
        %v1692 = vadd.f32 %v1337, %v1660
        %v1693 = vadd.f32 %v1338, %v1661
        %v1694 = vadd.f32 %v1339, %v1662
        %v1695 = vadd.f32 %v1340, %v1663
        %v1696 = vadd.f32 %v1341, %v1664
        %v1697 = vadd.f32 %v1342, %v1665
        %v1698 = vadd.f32 %v1343, %v1666
        %v1699 = vadd.f32 %v1344, %v1667
        %v1700 = vadd.f32 %v1345, %v1668
        %v1701 = vadd.f32 %v1346, %v1669
        %v1702 = vadd.f32 %v1347, %v1670
        %v1703 = vadd.f32 %v1348, %v1671
        %v1704 = vadd.f32 %v1349, %v1672
        %v1705 = vadd.f32 %v1350, %v1673
        %v1706 = vadd.f32 %v1351, %v1674
        %v1707 = vadd.f32 %v1352, %v1675
        %v1708 = vadd.f32 %v1353, %v1676
        %v1709 = vadd.f32 %v1354, %v1677
        %v1710 = vadd.f32 %v1355, %v1678
        %1711 = vst [vmem:[%s250] sm:$0xff] %v1679
        %1712 = vst [vmem:[%s250 + $0x8] sm:$0xff] %v1680
        %1713 = vst [vmem:[%s250 + $0x10] sm:$0xff] %v1681
        %1714 = vst [vmem:[%s250 + $0x18] sm:$0xff] %v1682
        %1715 = vst [vmem:[%s250 + $0x20] sm:$0xff] %v1683
        %1716 = vst [vmem:[%s250 + $0x28] sm:$0xff] %v1684
        %1717 = vst [vmem:[%s250 + $0x30] sm:$0xff] %v1685
        %1718 = vst [vmem:[%s250 + $0x38] sm:$0xff] %v1686
        %1719 = vst [vmem:[%s250 + $0x40] sm:$0xff] %v1687
        %1720 = vst [vmem:[%s250 + $0x48] sm:$0xff] %v1688
        %1721 = vst [vmem:[%s250 + $0x50] sm:$0xff] %v1689
        %1722 = vst [vmem:[%s250 + $0x58] sm:$0xff] %v1690
        %1723 = vst [vmem:[%s250 + $0x60] sm:$0xff] %v1691
        %1724 = vst [vmem:[%s250 + $0x68] sm:$0xff] %v1692
        %1725 = vst [vmem:[%s250 + $0x70] sm:$0xff] %v1693
        %1726 = vst [vmem:[%s250 + $0x78] sm:$0xff] %v1694
        %1727 = vst [vmem:[%s250 + $0x80] sm:$0xff] %v1695
        %1728 = vst [vmem:[%s250 + $0x88] sm:$0xff] %v1696
        %1729 = vst [vmem:[%s250 + $0x90] sm:$0xff] %v1697
        %1730 = vst [vmem:[%s250 + $0x98] sm:$0xff] %v1698
        %1731 = vst [vmem:[%s250 + $0xa0] sm:$0xff] %v1699
        %1732 = vst [vmem:[%s250 + $0xa8] sm:$0xff] %v1700
        %1733 = vst [vmem:[%s250 + $0xb0] sm:$0xff] %v1701
        %1734 = vst [vmem:[%s250 + $0xb8] sm:$0xff] %v1702
        %1735 = vst [vmem:[%s250 + $0xc0] sm:$0xff] %v1703
        %1736 = vst [vmem:[%s250 + $0xc8] sm:$0xff] %v1704
        %1737 = vst [vmem:[%s250 + $0xd0] sm:$0xff] %v1705
        %1738 = vst [vmem:[%s250 + $0xd8] sm:$0xff] %v1706
        %1739 = vst [vmem:[%s250 + $0xe0] sm:$0xff] %v1707
        %1740 = vst [vmem:[%s250 + $0xe8] sm:$0xff] %v1708
        %1741 = vst [vmem:[%s250 + $0xf0] sm:$0xff] %v1709
        %1742 = vst [vmem:[%s250 + $0xf8] sm:$0xff] %v1710
        %v1743 = vld [vmem:[%s215 + $0x100] sm:$0xff]
        %v1744 = vld [vmem:[%s215 + $0x108] sm:$0xff]
        %v1745 = vld [vmem:[%s215 + $0x110] sm:$0xff]
        %v1746 = vld [vmem:[%s215 + $0x118] sm:$0xff]
        %v1747 = vld [vmem:[%s215 + $0x120] sm:$0xff]
        %v1748 = vld [vmem:[%s215 + $0x128] sm:$0xff]
        %v1749 = vld [vmem:[%s215 + $0x130] sm:$0xff]
        %v1750 = vld [vmem:[%s215 + $0x138] sm:$0xff]
        %v1751 = vld [vmem:[#allocation7 + $0x100] sm:$0xff]
        %v1752 = vld [vmem:[#allocation7 + $0x108] sm:$0xff]
        %v1753 = vld [vmem:[#allocation7 + $0x110] sm:$0xff]
        %v1754 = vld [vmem:[#allocation7 + $0x118] sm:$0xff]
        %v1755 = vld [vmem:[#allocation7 + $0x120] sm:$0xff]
        %v1756 = vld [vmem:[#allocation7 + $0x128] sm:$0xff]
        %v1757 = vld [vmem:[#allocation7 + $0x130] sm:$0xff]
        %v1758 = vld [vmem:[#allocation7 + $0x138] sm:$0xff]
        %v1759 = vrot.slane %v1743, 7
        %v1760 = vrot.slane %v1744, 7
        %v1761 = vrot.slane %v1745, 7
        %v1762 = vrot.slane %v1746, 7
        %v1763 = vrot.slane %v1747, 7
        %v1764 = vrot.slane %v1748, 7
        %v1765 = vrot.slane %v1749, 7
        %v1766 = vrot.slane %v1750, 7
        %v1767 = vsel %vm353, %v1765, %v1766
        %v1768 = vsel %vm353, %v1764, %v1765
        %v1769 = vsel %vm353, %v1763, %v1764
        %v1770 = vsel %vm353, %v1762, %v1763
        %v1771 = vsel %vm353, %v1761, %v1762
        %v1772 = vsel %vm353, %v1760, %v1761
        %v1773 = vsel %vm353, %v1759, %v1760
        %v1774 = vsel %vm353, %v1766, %v1759
        %1776 = vset.pattern.permute.xlu0 0
        %1777 = vperm.xlu0 %1776, %v1751
        %v1778 = vpop.permute.xlu0 %1777
        %1781 = vset.pattern.permute.xlu0 0
        %1782 = vperm.xlu0 %1781, %v1752
        %v1783 = vpop.permute.xlu0 %1782
        %1786 = vset.pattern.permute.xlu0 0
        %1787 = vperm.xlu0 %1786, %v1753
        %v1788 = vpop.permute.xlu0 %1787
        %1791 = vset.pattern.permute.xlu0 0
        %1792 = vperm.xlu0 %1791, %v1754
        %v1793 = vpop.permute.xlu0 %1792
        %1796 = vset.pattern.permute.xlu0 0
        %1797 = vperm.xlu0 %1796, %v1755
        %v1798 = vpop.permute.xlu0 %1797
        %1801 = vset.pattern.permute.xlu0 0
        %1802 = vperm.xlu0 %1801, %v1756
        %v1803 = vpop.permute.xlu0 %1802
        %1806 = vset.pattern.permute.xlu0 0
        %1807 = vperm.xlu0 %1806, %v1757
        %v1808 = vpop.permute.xlu0 %1807
        %1811 = vset.pattern.permute.xlu0 0
        %1812 = vperm.xlu0 %1811, %v1758
        %v1813 = vpop.permute.xlu0 %1812
        %v1815 = vmul.f32 %v1774, %v1778
        %v1816 = vmul.f32 %v1773, %v1783
        %v1817 = vmul.f32 %v1772, %v1788
        %v1818 = vmul.f32 %v1771, %v1793
        %v1819 = vmul.f32 %v1770, %v1798
        %v1820 = vmul.f32 %v1769, %v1803
        %v1821 = vmul.f32 %v1768, %v1808
        %v1822 = vmul.f32 %v1767, %v1813
        %v1823 = vrot.slane %v1743, 1
        %v1824 = vrot.slane %v1744, 1
        %v1825 = vrot.slane %v1745, 1
        %v1826 = vrot.slane %v1746, 1
        %v1827 = vrot.slane %v1747, 1
        %v1828 = vrot.slane %v1748, 1
        %v1829 = vrot.slane %v1749, 1
        %v1830 = vrot.slane %v1750, 1
        %v1831 = vsel %vm610, %v1829, %v1830
        %v1832 = vsel %vm610, %v1828, %v1829
        %v1833 = vsel %vm610, %v1827, %v1828
        %v1834 = vsel %vm610, %v1826, %v1827
        %v1835 = vsel %vm610, %v1825, %v1826
        %v1836 = vsel %vm610, %v1824, %v1825
        %v1837 = vsel %vm610, %v1823, %v1824
        %v1838 = vsel %vm610, %v1830, %v1823
        %1839 = vset.pattern.permute.xlu0 1
        %1840 = vperm.xlu0 %1839, %v1751
        %v1841 = vpop.permute.xlu0 %1840
        %1843 = vset.pattern.permute.xlu0 1
        %1844 = vperm.xlu0 %1843, %v1752
        %v1845 = vpop.permute.xlu0 %1844
        %1847 = vset.pattern.permute.xlu0 1
        %1848 = vperm.xlu0 %1847, %v1753
        %v1849 = vpop.permute.xlu0 %1848
        %1851 = vset.pattern.permute.xlu0 1
        %1852 = vperm.xlu0 %1851, %v1754
        %v1853 = vpop.permute.xlu0 %1852
        %1855 = vset.pattern.permute.xlu0 1
        %1856 = vperm.xlu0 %1855, %v1755
        %v1857 = vpop.permute.xlu0 %1856
        %1859 = vset.pattern.permute.xlu0 1
        %1860 = vperm.xlu0 %1859, %v1756
        %v1861 = vpop.permute.xlu0 %1860
        %1863 = vset.pattern.permute.xlu0 1
        %1864 = vperm.xlu0 %1863, %v1757
        %v1865 = vpop.permute.xlu0 %1864
        %1867 = vset.pattern.permute.xlu0 1
        %1868 = vperm.xlu0 %1867, %v1758
        %v1869 = vpop.permute.xlu0 %1868
        %v1871 = vmul.f32 %v1837, %v1841
        %v1872 = vmul.f32 %v1836, %v1845
        %v1873 = vmul.f32 %v1835, %v1849
        %v1874 = vmul.f32 %v1834, %v1853
        %v1875 = vmul.f32 %v1833, %v1857
        %v1876 = vmul.f32 %v1832, %v1861
        %v1877 = vmul.f32 %v1831, %v1865
        %v1878 = vmul.f32 %v1838, %v1869
        %v1879 = vmul.f32 %v803, %v1815
        %v1880 = vmul.f32 %v803, %v1816
        %v1881 = vmul.f32 %v803, %v1817
        %v1882 = vmul.f32 %v803, %v1818
        %v1883 = vmul.f32 %v803, %v1819
        %v1884 = vmul.f32 %v803, %v1820
        %v1885 = vmul.f32 %v803, %v1821
        %v1886 = vmul.f32 %v803, %v1822
        %v1887 = vmul.f32 %v836, %v1743
        %v1888 = vmul.f32 %v836, %v1744
        %v1889 = vmul.f32 %v836, %v1745
        %v1890 = vmul.f32 %v836, %v1746
        %v1891 = vmul.f32 %v836, %v1747
        %v1892 = vmul.f32 %v836, %v1748
        %v1893 = vmul.f32 %v836, %v1749
        %v1894 = vmul.f32 %v836, %v1750
        %v1895 = vadd.f32 %v1879, %v1887
        %v1896 = vadd.f32 %v1880, %v1888
        %v1897 = vadd.f32 %v1881, %v1889
        %v1898 = vadd.f32 %v1882, %v1890
        %v1899 = vadd.f32 %v1883, %v1891
        %v1900 = vadd.f32 %v1884, %v1892
        %v1901 = vadd.f32 %v1885, %v1893
        %v1902 = vadd.f32 %v1886, %v1894
        %v1903 = vmul.f32 %v901, %v1871
        %v1904 = vmul.f32 %v901, %v1872
        %v1905 = vmul.f32 %v901, %v1873
        %v1906 = vmul.f32 %v901, %v1874
        %v1907 = vmul.f32 %v901, %v1875
        %v1908 = vmul.f32 %v901, %v1876
        %v1909 = vmul.f32 %v901, %v1877
        %v1910 = vmul.f32 %v901, %v1878
        %v1911 = vadd.f32 %v1895, %v1903
        %v1912 = vadd.f32 %v1896, %v1904
        %v1913 = vadd.f32 %v1897, %v1905
        %v1914 = vadd.f32 %v1898, %v1906
        %v1915 = vadd.f32 %v1899, %v1907
        %v1916 = vadd.f32 %v1900, %v1908
        %v1917 = vadd.f32 %v1901, %v1909
        %v1918 = vadd.f32 %v1902, %v1910
        %v1919 = vadd.f32 %v967, %v1911
        %v1920 = vadd.f32 %v967, %v1912
        %v1921 = vadd.f32 %v967, %v1913
        %v1922 = vadd.f32 %v967, %v1914
        %v1923 = vadd.f32 %v967, %v1915
        %v1924 = vadd.f32 %v967, %v1916
        %v1925 = vadd.f32 %v967, %v1917
        %v1926 = vadd.f32 %v967, %v1918
        %v1927 = vmul.f32 %v1001, %v1815
        %v1928 = vmul.f32 %v1001, %v1816
        %v1929 = vmul.f32 %v1001, %v1817
        %v1930 = vmul.f32 %v1001, %v1818
        %v1931 = vmul.f32 %v1001, %v1819
        %v1932 = vmul.f32 %v1001, %v1820
        %v1933 = vmul.f32 %v1001, %v1821
        %v1934 = vmul.f32 %v1001, %v1822
        %v1935 = vmul.f32 %v1034, %v1743
        %v1936 = vmul.f32 %v1034, %v1744
        %v1937 = vmul.f32 %v1034, %v1745
        %v1938 = vmul.f32 %v1034, %v1746
        %v1939 = vmul.f32 %v1034, %v1747
        %v1940 = vmul.f32 %v1034, %v1748
        %v1941 = vmul.f32 %v1034, %v1749
        %v1942 = vmul.f32 %v1034, %v1750
        %v1943 = vadd.f32 %v1927, %v1935
        %v1944 = vadd.f32 %v1928, %v1936
        %v1945 = vadd.f32 %v1929, %v1937
        %v1946 = vadd.f32 %v1930, %v1938
        %v1947 = vadd.f32 %v1931, %v1939
        %v1948 = vadd.f32 %v1932, %v1940
        %v1949 = vadd.f32 %v1933, %v1941
        %v1950 = vadd.f32 %v1934, %v1942
        %v1951 = vmul.f32 %v1099, %v1871
        %v1952 = vmul.f32 %v1099, %v1872
        %v1953 = vmul.f32 %v1099, %v1873
        %v1954 = vmul.f32 %v1099, %v1874
        %v1955 = vmul.f32 %v1099, %v1875
        %v1956 = vmul.f32 %v1099, %v1876
        %v1957 = vmul.f32 %v1099, %v1877
        %v1958 = vmul.f32 %v1099, %v1878
        %v1959 = vadd.f32 %v1943, %v1951
        %v1960 = vadd.f32 %v1944, %v1952
        %v1961 = vadd.f32 %v1945, %v1953
        %v1962 = vadd.f32 %v1946, %v1954
        %v1963 = vadd.f32 %v1947, %v1955
        %v1964 = vadd.f32 %v1948, %v1956
        %v1965 = vadd.f32 %v1949, %v1957
        %v1966 = vadd.f32 %v1950, %v1958
        %1967 = vset.pattern.permute.xlu0 2
        %1968 = vperm.xlu0 %1967, %v1751
        %v1969 = vpop.permute.xlu0 %1968
        %1971 = vset.pattern.permute.xlu0 2
        %1972 = vperm.xlu0 %1971, %v1752
        %v1973 = vpop.permute.xlu0 %1972
        %1975 = vset.pattern.permute.xlu0 2
        %1976 = vperm.xlu0 %1975, %v1753
        %v1977 = vpop.permute.xlu0 %1976
        %1979 = vset.pattern.permute.xlu0 2
        %1980 = vperm.xlu0 %1979, %v1754
        %v1981 = vpop.permute.xlu0 %1980
        %1983 = vset.pattern.permute.xlu0 2
        %1984 = vperm.xlu0 %1983, %v1755
        %v1985 = vpop.permute.xlu0 %1984
        %1987 = vset.pattern.permute.xlu0 2
        %1988 = vperm.xlu0 %1987, %v1756
        %v1989 = vpop.permute.xlu0 %1988
        %1991 = vset.pattern.permute.xlu0 2
        %1992 = vperm.xlu0 %1991, %v1757
        %v1993 = vpop.permute.xlu0 %1992
        %1995 = vset.pattern.permute.xlu0 2
        %1996 = vperm.xlu0 %1995, %v1758
        %v1997 = vpop.permute.xlu0 %1996
        %v1999 = vmul.f32 %v1966, %v1969
        %v2000 = vmul.f32 %v1959, %v1973
        %v2001 = vmul.f32 %v1960, %v1977
        %v2002 = vmul.f32 %v1961, %v1981
        %v2003 = vmul.f32 %v1962, %v1985
        %v2004 = vmul.f32 %v1963, %v1989
        %v2005 = vmul.f32 %v1964, %v1993
        %v2006 = vmul.f32 %v1965, %v1997
        %v2007 = vadd.f32 %v1919, %v1999
        %v2008 = vadd.f32 %v1920, %v2000
        %v2009 = vadd.f32 %v1921, %v2001
        %v2010 = vadd.f32 %v1922, %v2002
        %v2011 = vadd.f32 %v1923, %v2003
        %v2012 = vadd.f32 %v1924, %v2004
        %v2013 = vadd.f32 %v1925, %v2005
        %v2014 = vadd.f32 %v1926, %v2006
        %v2015 = vmul.f32 %v1356, %v1815
        %v2016 = vmul.f32 %v1356, %v1816
        %v2017 = vmul.f32 %v1356, %v1817
        %v2018 = vmul.f32 %v1356, %v1818
        %v2019 = vmul.f32 %v1356, %v1819
        %v2020 = vmul.f32 %v1356, %v1820
        %v2021 = vmul.f32 %v1356, %v1821
        %v2022 = vmul.f32 %v1356, %v1822
        %v2023 = vmul.f32 %v1389, %v1743
        %v2024 = vmul.f32 %v1389, %v1744
        %v2025 = vmul.f32 %v1389, %v1745
        %v2026 = vmul.f32 %v1389, %v1746
        %v2027 = vmul.f32 %v1389, %v1747
        %v2028 = vmul.f32 %v1389, %v1748
        %v2029 = vmul.f32 %v1389, %v1749
        %v2030 = vmul.f32 %v1389, %v1750
        %v2031 = vadd.f32 %v2015, %v2023
        %v2032 = vadd.f32 %v2016, %v2024
        %v2033 = vadd.f32 %v2017, %v2025
        %v2034 = vadd.f32 %v2018, %v2026
        %v2035 = vadd.f32 %v2019, %v2027
        %v2036 = vadd.f32 %v2020, %v2028
        %v2037 = vadd.f32 %v2021, %v2029
        %v2038 = vadd.f32 %v2022, %v2030
        %v2039 = vmul.f32 %v1454, %v1871
        %v2040 = vmul.f32 %v1454, %v1872
        %v2041 = vmul.f32 %v1454, %v1873
        %v2042 = vmul.f32 %v1454, %v1874
        %v2043 = vmul.f32 %v1454, %v1875
        %v2044 = vmul.f32 %v1454, %v1876
        %v2045 = vmul.f32 %v1454, %v1877
        %v2046 = vmul.f32 %v1454, %v1878
        %v2047 = vadd.f32 %v2031, %v2039
        %v2048 = vadd.f32 %v2032, %v2040
        %v2049 = vadd.f32 %v2033, %v2041
        %v2050 = vadd.f32 %v2034, %v2042
        %v2051 = vadd.f32 %v2035, %v2043
        %v2052 = vadd.f32 %v2036, %v2044
        %v2053 = vadd.f32 %v2037, %v2045
        %v2054 = vadd.f32 %v2038, %v2046
        %2055 = vset.pattern.permute.xlu0 3
        %2056 = vperm.xlu0 %2055, %v1751
        %v2057 = vpop.permute.xlu0 %2056
        %2059 = vset.pattern.permute.xlu0 3
        %2060 = vperm.xlu0 %2059, %v1752
        %v2061 = vpop.permute.xlu0 %2060
        %2063 = vset.pattern.permute.xlu0 3
        %2064 = vperm.xlu0 %2063, %v1753
        %v2065 = vpop.permute.xlu0 %2064
        %2067 = vset.pattern.permute.xlu0 3
        %2068 = vperm.xlu0 %2067, %v1754
        %v2069 = vpop.permute.xlu0 %2068
        %2071 = vset.pattern.permute.xlu0 3
        %2072 = vperm.xlu0 %2071, %v1755
        %v2073 = vpop.permute.xlu0 %2072
        %2075 = vset.pattern.permute.xlu0 3
        %2076 = vperm.xlu0 %2075, %v1756
        %v2077 = vpop.permute.xlu0 %2076
        %2079 = vset.pattern.permute.xlu0 3
        %2080 = vperm.xlu0 %2079, %v1757
        %v2081 = vpop.permute.xlu0 %2080
        %2083 = vset.pattern.permute.xlu0 3
        %2084 = vperm.xlu0 %2083, %v1758
        %v2085 = vpop.permute.xlu0 %2084
        %v2087 = vmul.f32 %v2048, %v2057
        %v2088 = vmul.f32 %v2049, %v2061
        %v2089 = vmul.f32 %v2050, %v2065
        %v2090 = vmul.f32 %v2051, %v2069
        %v2091 = vmul.f32 %v2052, %v2073
        %v2092 = vmul.f32 %v2053, %v2077
        %v2093 = vmul.f32 %v2054, %v2081
        %v2094 = vmul.f32 %v2047, %v2085
        %v2095 = vadd.f32 %v2007, %v2087
        %v2096 = vadd.f32 %v2008, %v2088
        %v2097 = vadd.f32 %v2009, %v2089
        %v2098 = vadd.f32 %v2010, %v2090
        %v2099 = vadd.f32 %v2011, %v2091
        %v2100 = vadd.f32 %v2012, %v2092
        %v2101 = vadd.f32 %v2013, %v2093
        %v2102 = vadd.f32 %v2014, %v2094
        %2103 = vst [vmem:[%s250 + $0x100] sm:$0xff] %v2095
        %2104 = vst [vmem:[%s250 + $0x108] sm:$0xff] %v2096
        %2105 = vst [vmem:[%s250 + $0x110] sm:$0xff] %v2097
        %2106 = vst [vmem:[%s250 + $0x118] sm:$0xff] %v2098
        %2107 = vst [vmem:[%s250 + $0x120] sm:$0xff] %v2099
        %2108 = vst [vmem:[%s250 + $0x128] sm:$0xff] %v2100
        %2109 = vst [vmem:[%s250 + $0x130] sm:$0xff] %v2101
        %2110 = vst [vmem:[%s250 + $0x138] sm:$0xff] %v2102
        %v2111 = vld [vmem:[%s215 + $0x140] sm:$0xff]
        %v2112 = vld [vmem:[%s215 + $0x148] sm:$0xff]
        %v2113 = vld [vmem:[#allocation7 + $0x140] sm:$0xff]
        %v2114 = vld [vmem:[#allocation7 + $0x148] sm:$0xff]
        %v2115 = vrot.slane %v2111, 7
        %v2116 = vrot.slane %v2112, 7
        %v2117 = vsel %vm353, %v2115, %v2116
        %v2118 = vsel %vm353, %v2116, %v2115
        %2120 = vset.pattern.permute.xlu0 0
        %2121 = vperm.xlu0 %2120, %v2113
        %v2122 = vpop.permute.xlu0 %2121
        %2125 = vset.pattern.permute.xlu0 0
        %2126 = vperm.xlu0 %2125, %v2114
        %v2127 = vpop.permute.xlu0 %2126
        %v2129 = vmul.f32 %v2118, %v2122
        %v2130 = vmul.f32 %v2117, %v2127
        %v2131 = vrot.slane %v2111, 1
        %v2132 = vrot.slane %v2112, 1
        %v2133 = vsel %vm610, %v2131, %v2132
        %v2134 = vsel %vm610, %v2132, %v2131
        %2135 = vset.pattern.permute.xlu0 1
        %2136 = vperm.xlu0 %2135, %v2113
        %v2137 = vpop.permute.xlu0 %2136
        %2139 = vset.pattern.permute.xlu0 1
        %2140 = vperm.xlu0 %2139, %v2114
        %v2141 = vpop.permute.xlu0 %2140
        %v2143 = vmul.f32 %v2133, %v2137
        %v2144 = vmul.f32 %v2134, %v2141
        %v2145 = vmul.f32 %v803, %v2129
        %v2146 = vmul.f32 %v803, %v2130
        %v2147 = vmul.f32 %v836, %v2111
        %v2148 = vmul.f32 %v836, %v2112
        %v2149 = vadd.f32 %v2145, %v2147
        %v2150 = vadd.f32 %v2146, %v2148
        %v2151 = vmul.f32 %v901, %v2143
        %v2152 = vmul.f32 %v901, %v2144
        %v2153 = vadd.f32 %v2149, %v2151
        %v2154 = vadd.f32 %v2150, %v2152
        %v2155 = vadd.f32 %v967, %v2153
        %v2156 = vadd.f32 %v967, %v2154
        %v2157 = vmul.f32 %v1001, %v2129
        %v2158 = vmul.f32 %v1001, %v2130
        %v2159 = vmul.f32 %v1034, %v2111
        %v2160 = vmul.f32 %v1034, %v2112
        %v2161 = vadd.f32 %v2157, %v2159
        %v2162 = vadd.f32 %v2158, %v2160
        %v2163 = vmul.f32 %v1099, %v2143
        %v2164 = vmul.f32 %v1099, %v2144
        %v2165 = vadd.f32 %v2161, %v2163
        %v2166 = vadd.f32 %v2162, %v2164
        %v2167 = vrot.slane %v2165, 4
        %v2168 = vrot.slane %v2166, 4
        %vm2169 = vcmp.lt.s32.totalorder %v352, 4
        %v2170 = vsel %vm2169, %v2167, %v2168
        %v2171 = vsel %vm2169, %v2168, %v2167
        %2172 = vset.pattern.permute.xlu0 2
        %2173 = vperm.xlu0 %2172, %v2113
        %v2174 = vpop.permute.xlu0 %2173
        %2176 = vset.pattern.permute.xlu0 2
        %2177 = vperm.xlu0 %2176, %v2114
        %v2178 = vpop.permute.xlu0 %2177
        %v2180 = vmul.f32 %v2171, %v2174
        %v2181 = vmul.f32 %v2170, %v2178
        %v2182 = vadd.f32 %v2155, %v2180
        %v2183 = vadd.f32 %v2156, %v2181
        %v2184 = vmul.f32 %v1356, %v2129
        %v2185 = vmul.f32 %v1356, %v2130
        %v2186 = vmul.f32 %v1389, %v2111
        %v2187 = vmul.f32 %v1389, %v2112
        %v2188 = vadd.f32 %v2184, %v2186
        %v2189 = vadd.f32 %v2185, %v2187
        %v2190 = vmul.f32 %v1454, %v2143
        %v2191 = vmul.f32 %v1454, %v2144
        %v2192 = vadd.f32 %v2188, %v2190
        %v2193 = vadd.f32 %v2189, %v2191
        %v2194 = vrot.slane %v2192, 4
        %v2195 = vrot.slane %v2193, 4
        %v2196 = vsel %vm2169, %v2194, %v2195
        %v2197 = vsel %vm2169, %v2195, %v2194
        %2198 = vset.pattern.permute.xlu0 3
        %2199 = vperm.xlu0 %2198, %v2113
        %v2200 = vpop.permute.xlu0 %2199
        %2202 = vset.pattern.permute.xlu0 3
        %2203 = vperm.xlu0 %2202, %v2114
        %v2204 = vpop.permute.xlu0 %2203
        %v2206 = vmul.f32 %v2196, %v2200
        %v2207 = vmul.f32 %v2197, %v2204
        %v2208 = vadd.f32 %v2182, %v2206
        %v2209 = vadd.f32 %v2183, %v2207
        %2210 = vst [vmem:[%s250 + $0x140] sm:$0xff] %v2208
        %2211 = vst [vmem:[%s250 + $0x148] sm:$0xff] %v2209
        %s2212 = sand.u32 %s119, 1
        %s2213 = scalar_lea.sflag [#allocation4], %s2212
        %s2214 = sand.u32 %s119, 1
        %s2215 = smul.addr %s2214, 336
        %s2216 = scalar_lea.vmem [#allocation8], %s2215
        // Predicated region
        $region49: #{dwconv_module.1} parent=35 // pred_check
          %p2217 = pneg %p129
        $region50: #{dwconv_module.1} parent=35 // pred_check_branch
          %2219 = sbr.rel (%p2217) target = $region52
        $region51: #{dwconv_module.1} parent=35 // pred_region
          %2221 = vsyncadd %s2213, 0
          %s2222 = smul.addr %s22, 42
          %s2223 = smul.addr %s2222, 8
          %s2224 = scalar_lea.hbm %s4, %s2223
          %s2225 = sshll.u32 %s2216, 4
          %s2226 = int_to_ptr.vmem [resolvable:$true] %s2225
          %s2227 = sshll.u32 %s2224, 4
          %s2228 = int_to_ptr.hbm [resolvable:$true] %s2227
          %2233 = dma.vmem_to_hbm [thread:$0]  %s2226, 5376, %s2228, %s2213, 128, 128, 8
        $region52: #{dwconv_module.1} parent=35 // pred_fallthru
          _
      $region36: #{dwconv_module.1} parent=5 // pred_fallthru
        _
      %p2234 = scmp.le.s32.totalorder 2, %s17
      // Predicated region
      $region53: #{dwconv_module.1} parent=5 // pred_check
        %p2235 = pneg %p2234
      $region54: #{dwconv_module.1} parent=5 // pred_check_branch
        %2237 = sbr.rel (%p2235) target = $region56
      $region55: #{dwconv_module.1} parent=5 // pred_region
        %s2238 = ssub.s32 %s17, 2
        // Predicated region
        $region57: #{dwconv_module.1} parent=55 // pred_check
          %p2239 = pneg %p135
        $region58: #{dwconv_module.1} parent=55 // pred_check_branch
          %2241 = sbr.rel (%p2239) target = $region60
        $region59: #{dwconv_module.1} parent=55 // pred_region
          %s2242 = sand.u32 %s120, 1
          %s2243 = scalar_lea.sflag [#allocation4], %s2242
          %s2244 = sand.u32 %s120, 1
          %s2245 = smul.addr %s2244, 336
          %s2246 = scalar_lea.vmem [#allocation8], %s2245
          %2248 = dma.done %s2243, 5376
        $region60: #{dwconv_module.1} parent=55 // pred_fallthru
          _
      $region56: #{dwconv_module.1} parent=5 // pred_fallthru
        _
    $region6: #{dwconv_module.1} parent=1 // loop_footer
      %s21 = sadd.s32 1, %s17
    $region7: #{dwconv_module.1} parent=1 // loop_footer_branch
      %16 = sbr.rel target = $region3
    $region8: #{dwconv_module.1} parent=1 // loop_exit
      _
    %2249 = vsyncpa [#allocation3], 1
    %s2250 = scalar_lea.sflag [#allocation3], 1
    %2251 = vsyncpa %s2250, 1
    %2252 = vsyncpa [#allocation6], 1
    %2253 = vsyncpa [#allocation4], 1
    %s2254 = scalar_lea.sflag [#allocation4], 1
    %2255 = vsyncpa %s2254, 1

</llo_original>
